<compile_context>
chip_gen: v7x
topology: tpu7x:2x2x1
jax: 0.10.0
libtpu: 0.0.40
codegen_flags: <defaults>
</compile_context>

<pallas_src>
import functools

import jax
import jax.numpy as jnp
from jax import lax
from jax.experimental import pallas as pl
from jax.experimental.pallas import tpu as pltpu


def _round_up(v, m):
    return ((v + m - 1) // m) * m


def _net_kernel(x_ref, adj_ref, w1_ref, b1_ref, w2_ref, b2_ref, o_ref,
                z_buf, z0_buf, acc_ref, *, K: int, alpha: float, n_classes: int):
    k = pl.program_id(0)          # propagation step
    i = pl.program_id(1)          # node row block
    j = pl.program_id(2)          # node col block (reduction over A @ z)
    n_col = pl.num_programs(2)

    # ---- zero the A @ z accumulator at the start of each row block ---------------
    @pl.when(j == 0)
    def _zero_acc():
        acc_ref[...] = jnp.zeros_like(acc_ref)

    # ---- fused MLP: z0[j] = lin2(relu(lin1(x[j]))) --------------------------------
    # Computed lazily while the first propagation pass (k==0, i==0) walks the j
    # axis, just before z0[j] is first needed.  x is streamed per row block.
    @pl.when((k == 0) & (i == 0))
    def _compute_z0_block():
        # TODO(synk): dropout (training mode) not implemented — inference identity.
        xb = x_ref[...]
        h = jnp.dot(xb, w1_ref[...], preferred_element_type=jnp.float32) + b1_ref[...]
        h = jnp.maximum(h, 0.0)
        z0b = jnp.dot(h, w2_ref[...], preferred_element_type=jnp.float32) + b2_ref[...]
        z0_buf[j] = z0b
        z_buf[0, j] = z0b.astype(jnp.bfloat16)

    # ---- APPNP step k, row block i: acc = sum_j A[i, j] @ z_k[j] ------------------
    rs = k % 2            # read slot  (holds z_k)
    ws = (k + 1) % 2      # write slot (will hold z_{k+1})

    # bf16 x bf16 on the MXU, f32 accumulation.
    acc_ref[...] += jnp.dot(adj_ref[...], z_buf[rs, j],
                            preferred_element_type=jnp.float32)

    @pl.when(j == n_col - 1)
    def _finalize_row_block():
        z_new = (1.0 - alpha) * acc_ref[...] + alpha * z0_buf[i]
        z_buf[ws, i] = z_new.astype(jnp.bfloat16)

        @pl.when(k == K - 1)
        def _write_output():
            # masked (lane-padded) log_softmax over the class dimension
            lane = lax.broadcasted_iota(jnp.int32, z_new.shape, 1)
            zm = jnp.where(lane < n_classes, z_new, -1e30)
            m = jnp.max(zm, axis=-1, keepdims=True)
            s = zm - m
            lse = jnp.log(jnp.sum(jnp.exp(s), axis=-1, keepdims=True))
            o_ref[...] = (s - lse).astype(o_ref.dtype)


def net_forward(x, adj_t, w1, b1, w2, b2, *, K: int, alpha: float, block: int = 512):
    """x: [N, C_in], adj_t: [N, N] (row-normalized), w1: [C_in, H], b1: [1, H],
       w2: [H, C_out], b2: [1, C_out]  ->  log-probs [N, C_out]."""
    assert K >= 1, "APPNP propagation needs K >= 1"
    N, c_in = x.shape
    H = w1.shape[1]
    c_out = w2.shape[1]

    LANE = 128
    c_pad = _round_up(c_out, LANE)                  # lane-dense class dim
    blk = min(block, _round_up(N, LANE))            # adjacency tile (rows & cols)
    n_pad = _round_up(N, blk)
    n_blk = n_pad // blk

    f32 = jnp.float32
    x_p = jnp.zeros((n_pad, c_in), f32).at[:N, :].set(x.astype(f32))
    adj_p = jnp.zeros((n_pad, n_pad), jnp.bfloat16).at[:N, :N].set(
        adj_t.astype(jnp.bfloat16))
    w1_p = w1.astype(f32)
    b1_p = jnp.reshape(b1, (1, H)).astype(f32)
    w2_p = jnp.zeros((H, c_pad), f32).at[:, :c_out].set(w2.astype(f32))
    b2_p = jnp.zeros((1, c_pad), f32).at[:, :c_out].set(
        jnp.reshape(b2, (1, c_out)).astype(f32))

    kernel = functools.partial(_net_kernel, K=K, alpha=alpha, n_classes=c_out)

    # small operands: full-array blocks, resident for the whole grid
    const = lambda shape: pl.BlockSpec(shape, lambda k, i, j: (0,) * len(shape))

    # x is only consumed during the MLP pre-pass (k==0, i==0, block j); afterwards
    # its index collapses to block 0 so it is never re-DMA'd.
    x_spec = pl.BlockSpec(
        (blk, c_in),
        lambda k, i, j: (jnp.where((k == 0) & (i == 0), j, 0), 0))

    out = pl.pallas_call(
        kernel,
        out_shape=jax.ShapeDtypeStruct((n_pad, c_pad), f32),
        grid_spec=pltpu.PrefetchScalarGridSpec(
            num_scalar_prefetch=0,
            grid=(K, n_blk, n_blk),
            in_specs=[
                x_spec,                                             # x (streamed once)
                pl.BlockSpec((blk, blk), lambda k, i, j: (i, j)),   # adj tiles (streamed, bf16)
                const((c_in, H)),                                   # w1
                const((1, H)),                                      # b1
                const((H, c_pad)),                                  # w2 (lane-padded)
                const((1, c_pad)),                                  # b2 (lane-padded)
            ],
            out_specs=pl.BlockSpec((blk, c_pad), lambda k, i, j: (i, 0)),
            scratch_shapes=[
                pltpu.VMEM((2, n_blk, blk, c_pad), jnp.bfloat16),  # z ping-pong across steps
                pltpu.VMEM((n_blk, blk, c_pad), f32),              # z0 (teleport term)
                pltpu.VMEM((blk, c_pad), f32),                     # A @ z row-block accumulator
            ],
        ),
        compiler_params=pltpu.CompilerParams(
            # k is a serial recurrence; the row/col block axes carry state through
            # core-local VMEM scratch, so they must not be split across TensorCores.
            dimension_semantics=("arbitrary", "arbitrary", "arbitrary"),
            vmem_limit_bytes=48 * 1024 * 1024,   # raise v5e's 16 MiB default, < v7x physical
        ),
    )(x_p, adj_p, w1_p, b1_p, w2_p, b2_p)

    return out[:N, :c_out]


def _reference(x, adj_bf16, w1, b1, w2, b2, K, alpha):
    """Pure-JAX reference mirroring the kernel's bf16 quantization of the
    adjacency and of the propagation matmul operand (f32 accumulation)."""
    hi = lax.Precision.HIGHEST
    adj = adj_bf16.astype(jnp.float32)
    h = jnp.maximum(jnp.dot(x, w1, precision=hi) + b1, 0.0)
    z0 = jnp.dot(h, w2, precision=hi) + b2
    z = z0
    for _ in range(K):
        zq = z.astype(jnp.bfloat16).astype(jnp.float32)
        z = (1.0 - alpha) * jnp.dot(adj, zq, precision=hi) + alpha * z0
    return jax.nn.log_softmax(z, axis=-1)


if __name__ == "__main__":
    # Small synthetic problem consistent with the module's forward:
    #   N nodes, in_channels -> hidden_channels -> out_channels, APPNP(K, alpha)
    N, in_channels, hidden_channels, out_channels = 128, 64, 32, 16
    K, alpha = 8, 0.1

    key = jax.random.PRNGKey(0)
    k_x, k_a, k_w1, k_b1, k_w2, k_b2 = jax.random.split(key, 6)

    x = jax.random.normal(k_x, (N, in_channels), dtype=jnp.float32)

    # Dense symmetric random graph, row-normalized (plays the role of adj_t).
    a = (jax.random.uniform(k_a, (N, N)) < 0.05).astype(jnp.float32)
    a = jnp.maximum(a, a.T) + jnp.eye(N, dtype=jnp.float32)
    adj_t = a / jnp.sum(a, axis=1, keepdims=True)

    # Deterministic parameter init (uniform, like torch.nn.Linear's bound).
    bound1 = 1.0 / (in_channels ** 0.5)
    bound2 = 1.0 / (hidden_channels ** 0.5)
    w1 = jax.random.uniform(k_w1, (in_channels, hidden_channels),
                            minval=-bound1, maxval=bound1, dtype=jnp.float32)
    b1 = jax.random.uniform(k_b1, (1, hidden_channels),
                            minval=-bound1, maxval=bound1, dtype=jnp.float32)
    w2 = jax.random.uniform(k_w2, (hidden_channels, out_channels),
                            minval=-bound2, maxval=bound2, dtype=jnp.float32)
    b2 = jax.random.uniform(k_b2, (1, out_channels),
                            minval=-bound2, maxval=bound2, dtype=jnp.float32)

    out = net_forward(x, adj_t, w1, b1, w2, b2, K=K, alpha=alpha)
    out = jax.block_until_ready(out)

    ref = _reference(x, adj_t.astype(jnp.bfloat16), w1, b1, w2, b2, K, alpha)
    assert out.shape == (N, out_channels)
    # Kernel and reference apply identical bf16 quantization; remaining diffs are
    # f32 accumulation-order noise, well under 1e-3.
    assert jnp.allclose(out, ref, atol=1e-3, rtol=1e-3), "mismatch vs. JAX reference"

    print("KERNEL_OK")
</pallas_src>

<mosaic_0001>
module attributes {stable_mosaic.version = 11 : i64} {
  func.func @_net_kernel(%arg0: i32, %arg1: i32, %arg2: i32, %arg3: memref<128x64xf32, #tpu.memory_space<vmem>>, %arg4: memref<128x128xbf16, #tpu.memory_space<vmem>>, %arg5: memref<64x32xf32, #tpu.memory_space<vmem>>, %arg6: memref<1x32xf32, #tpu.memory_space<vmem>>, %arg7: memref<32x128xf32, #tpu.memory_space<vmem>>, %arg8: memref<1x128xf32, #tpu.memory_space<vmem>>, %arg9: memref<128x128xf32, #tpu.memory_space<vmem>>, %arg10: memref<2x1x128x128xbf16, #tpu.memory_space<vmem>>, %arg11: memref<1x128x128xf32, #tpu.memory_space<vmem>>, %arg12: memref<128x128xf32, #tpu.memory_space<vmem>>) attributes {dimension_semantics = [#tpu.dimension_semantics<arbitrary>, #tpu.dimension_semantics<arbitrary>, #tpu.dimension_semantics<arbitrary>], iteration_bounds = array<i64: 8, 1, 1>, scalar_prefetch = 0 : i64, scratch_operands = 3 : i64, tpu.core_type = #tpu.core_type<tc>, window_params = [{transform_indices = @transform_0, window_bounds = array<i64: 128, 64>}, {transform_indices = @transform_1, window_bounds = array<i64: 128, 128>}, {pipeline_mode = #tpu.pipeline_mode<synchronous>, transform_indices = @transform_2, window_bounds = array<i64: 64, 32>}, {pipeline_mode = #tpu.pipeline_mode<synchronous>, transform_indices = @transform_3, window_bounds = array<i64: 1, 32>}, {pipeline_mode = #tpu.pipeline_mode<synchronous>, transform_indices = @transform_4, window_bounds = array<i64: 32, 128>}, {pipeline_mode = #tpu.pipeline_mode<synchronous>, transform_indices = @transform_5, window_bounds = array<i64: 1, 128>}, {transform_indices = @transform_6, window_bounds = array<i64: 128, 128>}]} {
    %c0_i32 = arith.constant 0 : i32
    %0 = arith.cmpi eq, %arg2, %c0_i32 : i32
    %1 = arith.extui %0 : i1 to i32
    %c0_i32_0 = arith.constant 0 : i32
    %2 = arith.cmpi ne, %1, %c0_i32_0 : i32
    scf.if %2 {
      %cst_24 = arith.constant 0.000000e+00 : f32
      %41 = vector.broadcast %cst_24 : f32 to vector<128x128xf32>
      %c0_25 = arith.constant 0 : index
      %c0_26 = arith.constant 0 : index
      %42 = vector.load %arg12[%c0_25, %c0_26] : memref<128x128xf32, #tpu.memory_space<vmem>>, vector<128x128xf32>
      tpu.vector_store %arg12[%c0_25, %c0_26], %41 {strides = array<i32>} : memref<128x128xf32, #tpu.memory_space<vmem>>, vector<128x128xf32>,
    } else {
    }
    %c0_i32_1 = arith.constant 0 : i32
    %3 = arith.cmpi eq, %arg0, %c0_i32_1 : i32
    %c0_i32_2 = arith.constant 0 : i32
    %4 = arith.cmpi eq, %arg1, %c0_i32_2 : i32
    %5 = arith.andi %3, %4 : i1
    %6 = arith.extui %5 : i1 to i32
    %c0_i32_3 = arith.constant 0 : i32
    %7 = arith.cmpi ne, %6, %c0_i32_3 : i32
    scf.if %7 {
      %c0_24 = arith.constant 0 : index
      %c0_25 = arith.constant 0 : index
      %41 = vector.load %arg3[%c0_24, %c0_25] : memref<128x64xf32, #tpu.memory_space<vmem>>, vector<128x64xf32>
      %c0_26 = arith.constant 0 : index
      %c0_27 = arith.constant 0 : index
      %42 = vector.load %arg5[%c0_26, %c0_27] : memref<64x32xf32, #tpu.memory_space<vmem>>, vector<64x32xf32>
      %cst_28 = arith.constant dense<0.000000e+00> : vector<128x32xf32>
      %43 = tpu.matmul %41, %42, %cst_28 {dimension_numbers = #tpu.dot_dimension_numbers<[1], [0], [0], [1], [0, 0, 1, 1], [], []>} : vector<128x64xf32>, vector<64x32xf32>, vector<128x32xf32> -> vector<128x32xf32>
      %c0_29 = arith.constant 0 : index
      %c0_30 = arith.constant 0 : index
      %44 = vector.load %arg6[%c0_29, %c0_30] : memref<1x32xf32, #tpu.memory_space<vmem>>, vector<1x32xf32>
      %45 = vector.broadcast %44 : vector<1x32xf32> to vector<128x32xf32>
      %46 = arith.addf %43, %45 : vector<128x32xf32>
      %cst_31 = arith.constant 0.000000e+00 : f32
      %47 = vector.broadcast %cst_31 : f32 to vector<128x32xf32>
      %48 = arith.maximumf %46, %47 : vector<128x32xf32>
      %c0_32 = arith.constant 0 : index
      %c0_33 = arith.constant 0 : index
      %49 = vector.load %arg7[%c0_32, %c0_33] : memref<32x128xf32, #tpu.memory_space<vmem>>, vector<32x128xf32>
      %cst_34 = arith.constant dense<0.000000e+00> : vector<128x128xf32>
      %50 = tpu.matmul %48, %49, %cst_34 {dimension_numbers = #tpu.dot_dimension_numbers<[1], [0], [0], [1], [0, 0, 1, 1], [], []>} : vector<128x32xf32>, vector<32x128xf32>, vector<128x128xf32> -> vector<128x128xf32>
      %c0_35 = arith.constant 0 : index
      %c0_36 = arith.constant 0 : index
      %51 = vector.load %arg8[%c0_35, %c0_36] : memref<1x128xf32, #tpu.memory_space<vmem>>, vector<1x128xf32>
      %52 = vector.broadcast %51 : vector<1x128xf32> to vector<128x128xf32>
      %53 = arith.addf %50, %52 : vector<128x128xf32>
      %54 = arith.index_cast %arg2 : i32 to index
      %c0_37 = arith.constant 0 : index
      %c0_38 = arith.constant 0 : index
      %55 = vector.load %arg11[%54, %c0_37, %c0_38] : memref<1x128x128xf32, #tpu.memory_space<vmem>>, vector<1x128x128xf32>
      %56 = vector.shape_cast %55 : vector<1x128x128xf32> to vector<128x128xf32>
      %57 = vector.shape_cast %53 : vector<128x128xf32> to vector<1x128x128xf32>
      tpu.vector_store %arg11[%54, %c0_37, %c0_38], %57 {strides = array<i32>} : memref<1x128x128xf32, #tpu.memory_space<vmem>>, vector<1x128x128xf32>,
      %58 = arith.truncf %53 : vector<128x128xf32> to vector<128x128xbf16>
      %c0_39 = arith.constant 0 : index
      %59 = arith.index_cast %arg2 : i32 to index
      %c0_40 = arith.constant 0 : index
      %c0_41 = arith.constant 0 : index
      %60 = vector.load %arg10[%c0_39, %59, %c0_40, %c0_41] : memref<2x1x128x128xbf16, #tpu.memory_space<vmem>>, vector<1x1x128x128xbf16>
      %61 = vector.shape_cast %60 : vector<1x1x128x128xbf16> to vector<128x128xbf16>
      %62 = vector.shape_cast %58 : vector<128x128xbf16> to vector<1x1x128x128xbf16>
      tpu.vector_store %arg10[%c0_39, %59, %c0_40, %c0_41], %62 {strides = array<i32>} : memref<2x1x128x128xbf16, #tpu.memory_space<vmem>>, vector<1x1x128x128xbf16>,
    } else {
    }
    %c2_i32 = arith.constant 2 : i32
    %c0_i32_4 = arith.constant 0 : i32
    %8 = arith.cmpi eq, %c2_i32, %c0_i32_4 : i32
    %c1_i32 = arith.constant 1 : i32
    %9 = arith.select %8, %c1_i32, %c2_i32 : i32
    %10 = arith.remsi %arg0, %9 : i32
    %c0_i32_5 = arith.constant 0 : i32
    %11 = arith.cmpi ne, %10, %c0_i32_5 : i32
    %c0_i32_6 = arith.constant 0 : i32
    %12 = arith.cmpi slt, %10, %c0_i32_6 : i32
    %c0_i32_7 = arith.constant 0 : i32
    %13 = arith.cmpi slt, %9, %c0_i32_7 : i32
    %14 = arith.xori %12, %13 : i1
    %15 = arith.andi %14, %11 : i1
    %16 = arith.addi %10, %9 : i32
    %17 = arith.select %15, %16, %10 : i32
    %c1_i32_8 = arith.constant 1 : i32
    %18 = arith.addi %arg0, %c1_i32_8 : i32
    %c2_i32_9 = arith.constant 2 : i32
    %c0_i32_10 = arith.constant 0 : i32
    %19 = arith.cmpi eq, %c2_i32_9, %c0_i32_10 : i32
    %c1_i32_11 = arith.constant 1 : i32
    %20 = arith.select %19, %c1_i32_11, %c2_i32_9 : i32
    %21 = arith.remsi %18, %20 : i32
    %c0_i32_12 = arith.constant 0 : i32
    %22 = arith.cmpi ne, %21, %c0_i32_12 : i32
    %c0_i32_13 = arith.constant 0 : i32
    %23 = arith.cmpi slt, %21, %c0_i32_13 : i32
    %c0_i32_14 = arith.constant 0 : i32
    %24 = arith.cmpi slt, %20, %c0_i32_14 : i32
    %25 = arith.xori %23, %24 : i1
    %26 = arith.andi %25, %22 : i1
    %27 = arith.addi %21, %20 : i32
    %28 = arith.select %26, %27, %21 : i32
    %c0 = arith.constant 0 : index
    %c0_15 = arith.constant 0 : index
    %29 = vector.load %arg12[%c0, %c0_15] : memref<128x128xf32, #tpu.memory_space<vmem>>, vector<128x128xf32>
    %c0_16 = arith.constant 0 : index
    %c0_17 = arith.constant 0 : index
    %30 = vector.load %arg4[%c0_16, %c0_17] : memref<128x128xbf16, #tpu.memory_space<vmem>>, vector<128x128xbf16>
    %31 = arith.index_cast %17 : i32 to index
    %32 = arith.index_cast %arg2 : i32 to index
    %c0_18 = arith.constant 0 : index
    %c0_19 = arith.constant 0 : index
    %33 = vector.load %arg10[%31, %32, %c0_18, %c0_19] : memref<2x1x128x128xbf16, #tpu.memory_space<vmem>>, vector<1x1x128x128xbf16>
    %34 = vector.shape_cast %33 : vector<1x1x128x128xbf16> to vector<128x128xbf16>
    %cst = arith.constant dense<0.000000e+00> : vector<128x128xf32>
    %35 = tpu.matmul %30, %34, %cst {dimension_numbers = #tpu.dot_dimension_numbers<[1], [0], [0], [1], [0, 0, 1, 1], [], []>} : vector<128x128xbf16>, vector<128x128xbf16>, vector<128x128xf32> -> vector<128x128xf32>
    %36 = arith.addf %29, %35 : vector<128x128xf32>
    %c0_20 = arith.constant 0 : index
    %c0_21 = arith.constant 0 : index
    %37 = vector.load %arg12[%c0_20, %c0_21] : memref<128x128xf32, #tpu.memory_space<vmem>>, vector<128x128xf32>
    tpu.vector_store %arg12[%c0_20, %c0_21], %36 {strides = array<i32>} : memref<128x128xf32, #tpu.memory_space<vmem>>, vector<128x128xf32>,
    %c0_i32_22 = arith.constant 0 : i32
    %38 = arith.cmpi eq, %arg2, %c0_i32_22 : i32
    %39 = arith.extui %38 : i1 to i32
    %c0_i32_23 = arith.constant 0 : i32
    %40 = arith.cmpi ne, %39, %c0_i32_23 : i32
    scf.if %40 {
      %c0_24 = arith.constant 0 : index
      %c0_25 = arith.constant 0 : index
      %41 = vector.load %arg12[%c0_24, %c0_25] : memref<128x128xf32, #tpu.memory_space<vmem>>, vector<128x128xf32>
      %cst_26 = arith.constant 0.899999976 : f32
      %42 = vector.broadcast %cst_26 : f32 to vector<128x128xf32>
      %43 = arith.mulf %42, %41 : vector<128x128xf32>
      %44 = arith.index_cast %arg1 : i32 to index
      %c0_27 = arith.constant 0 : index
      %c0_28 = arith.constant 0 : index
      %45 = vector.load %arg11[%44, %c0_27, %c0_28] : memref<1x128x128xf32, #tpu.memory_space<vmem>>, vector<1x128x128xf32>
      %46 = vector.shape_cast %45 : vector<1x128x128xf32> to vector<128x128xf32>
      %cst_29 = arith.constant 1.000000e-01 : f32
      %47 = vector.broadcast %cst_29 : f32 to vector<128x128xf32>
      %48 = arith.mulf %47, %46 : vector<128x128xf32>
      %49 = arith.addf %43, %48 : vector<128x128xf32>
      %50 = arith.truncf %49 : vector<128x128xf32> to vector<128x128xbf16>
      %51 = arith.index_cast %28 : i32 to index
      %52 = arith.index_cast %arg1 : i32 to index
      %c0_30 = arith.constant 0 : index
      %c0_31 = arith.constant 0 : index
      %53 = vector.load %arg10[%51, %52, %c0_30, %c0_31] : memref<2x1x128x128xbf16, #tpu.memory_space<vmem>>, vector<1x1x128x128xbf16>
      %54 = vector.shape_cast %53 : vector<1x1x128x128xbf16> to vector<128x128xbf16>
      %55 = vector.shape_cast %50 : vector<128x128xbf16> to vector<1x1x128x128xbf16>
      tpu.vector_store %arg10[%51, %52, %c0_30, %c0_31], %55 {strides = array<i32>} : memref<2x1x128x128xbf16, #tpu.memory_space<vmem>>, vector<1x1x128x128xbf16>,
      %c7_i32 = arith.constant 7 : i32
      %56 = arith.cmpi eq, %arg0, %c7_i32 : i32
      %57 = arith.extui %56 : i1 to i32
      %c0_i32_32 = arith.constant 0 : i32
      %58 = arith.cmpi ne, %57, %c0_i32_32 : i32
      scf.if %58 {
        %59 = tpu.iota {dimensions = array<i32: 1>} : vector<128x128xi32>
        %c16_i32 = arith.constant 16 : i32
        %60 = vector.broadcast %c16_i32 : i32 to vector<128x128xi32>
        %61 = arith.cmpi slt, %59, %60 : vector<128x128xi32>
        %cst_33 = arith.constant -1.000000e+30 : f32
        %62 = vector.broadcast %cst_33 : f32 to vector<128x128xf32>
        %63 = arith.select %61, %49, %62 : vector<128x128xi1>, vector<128x128xf32>
        %cst_34 = arith.constant dense<0xFF800000> : vector<128xf32>
        %64 = vector.multi_reduction <maximumf>, %63, %cst_34 [1] : vector<128x128xf32> to vector<128xf32>
        %65 = vector.shape_cast %64 : vector<128xf32> to vector<128x1xf32>
        %66 = vector.broadcast %65 : vector<128x1xf32> to vector<128x128xf32>
        %67 = arith.subf %63, %66 : vector<128x128xf32>
        %68 = math.exp %67 : vector<128x128xf32>
        %cst_35 = arith.constant dense<0.000000e+00> : vector<128xf32>
        %69 = vector.multi_reduction <add>, %68, %cst_35 [1] : vector<128x128xf32> to vector<128xf32>
        %70 = vector.shape_cast %69 : vector<128xf32> to vector<128x1xf32>
        %71 = math.log %70 : vector<128x1xf32>
        %72 = vector.broadcast %71 : vector<128x1xf32> to vector<128x128xf32>
        %73 = arith.subf %67, %72 : vector<128x128xf32>
        %c0_36 = arith.constant 0 : index
        %c0_37 = arith.constant 0 : index
        %74 = vector.load %arg9[%c0_36, %c0_37] : memref<128x128xf32, #tpu.memory_space<vmem>>, vector<128x128xf32>
        tpu.vector_store %arg9[%c0_36, %c0_37], %73 {strides = array<i32>} : memref<128x128xf32, #tpu.memory_space<vmem>>, vector<128x128xf32>,
      } else {
      }
    } else {
    }
    return
  }
  func.func @transform_0(%arg0: i32, %arg1: i32, %arg2: i32) -> (i32, i32) {
    %c0_i32 = arith.constant 0 : i32
    %0 = arith.cmpi eq, %arg0, %c0_i32 : i32
    %c0_i32_0 = arith.constant 0 : i32
    %1 = arith.cmpi eq, %arg1, %c0_i32_0 : i32
    %2 = arith.andi %0, %1 : i1
    %c0_i32_1 = arith.constant 0 : i32
    %3 = arith.select %2, %arg2, %c0_i32_1 : i32
    %c0_i32_2 = arith.constant 0 : i32
    %c0_i32_3 = arith.constant 0 : i32
    return %3, %c0_i32_2 : i32, i32
  }
  func.func @transform_1(%arg0: i32, %arg1: i32, %arg2: i32) -> (i32, i32) {
    %c0_i32 = arith.constant 0 : i32
    return %arg1, %arg2 : i32, i32
  }
  func.func @transform_2(%arg0: i32, %arg1: i32, %arg2: i32) -> (i32, i32) {
    %c0_i32 = arith.constant 0 : i32
    %c0_i32_0 = arith.constant 0 : i32
    %c0_i32_1 = arith.constant 0 : i32
    return %c0_i32, %c0_i32_0 : i32, i32
  }
  func.func @transform_3(%arg0: i32, %arg1: i32, %arg2: i32) -> (i32, i32) {
    %c0_i32 = arith.constant 0 : i32
    %c0_i32_0 = arith.constant 0 : i32
    %c0_i32_1 = arith.constant 0 : i32
    return %c0_i32, %c0_i32_0 : i32, i32
  }
  func.func @transform_4(%arg0: i32, %arg1: i32, %arg2: i32) -> (i32, i32) {
    %c0_i32 = arith.constant 0 : i32
    %c0_i32_0 = arith.constant 0 : i32
    %c0_i32_1 = arith.constant 0 : i32
    return %c0_i32, %c0_i32_0 : i32, i32
  }
  func.func @transform_5(%arg0: i32, %arg1: i32, %arg2: i32) -> (i32, i32) {
    %c0_i32 = arith.constant 0 : i32
    %c0_i32_0 = arith.constant 0 : i32
    %c0_i32_1 = arith.constant 0 : i32
    return %c0_i32, %c0_i32_0 : i32, i32
  }
  func.func @transform_6(%arg0: i32, %arg1: i32, %arg2: i32) -> (i32, i32) {
    %c0_i32 = arith.constant 0 : i32
    %c0_i32_0 = arith.constant 0 : i32
    return %arg1, %c0_i32 : i32, i32
  }
}

</mosaic_0001>

<llo_original>
// kernel: tpu_custom_call.1
$region0: #{tpu_custom_call.1}
  #allocation0 [shape = 'u32[]', space=smem, size = 0x4, offset = 0x4, fixed_abs, tag = 'smem constant byte address 0x4 - core index']
  #allocation1 [shape = 'u32[144,128]{1,0:T(1,128)}', space=vmem, size = 0x12000, scoped, tag = 'internal scratch']
  #allocation2 [shape = 'bf16[2,1,128,128]{3,2,1,0:T(16,128)(2,1)}', space=vmem, size = 0x10000, scoped, tag = 'scratch operand']
  #allocation3 [shape = 'f32[1,128,128]{2,1,0:T(8,128)}', space=vmem, size = 0x10000, scoped, tag = 'scratch operand']
  #allocation4 [shape = 'f32[128,128]{1,0:T(8,128)}', space=vmem, size = 0x10000, scoped, tag = 'scratch operand']
  %s0 = inlined_call_operand.vmem [shape: f32[128,64], index: 0, kind: input, shape index: {}]
  %s1 = inlined_call_operand.vmem [shape: bf16[128,128], index: 1, kind: input, shape index: {}]
  %s2 = inlined_call_operand.vmem [shape: f32[64,32], index: 2, kind: input, shape index: {}]
  %s3 = inlined_call_operand.vmem [shape: f32[1,32], index: 3, kind: input, shape index: {}]
  %s4 = inlined_call_operand.vmem [shape: f32[32,128], index: 4, kind: input, shape index: {}]
  %s5 = inlined_call_operand.vmem [shape: f32[1,128], index: 5, kind: input, shape index: {}]
  %s6 = inlined_call_operand.hbm [shape: f32[128,128], index: 6, kind: output, shape index: {}]
  %s7 = sld [smem:[#allocation0]]
  $region73: #{tpu_custom_call.1} parent=0
    _
  %s9 = ssub.s32 1, %s7
  %s10 = scalar_select 0, %s9, %s7
  $region1: #{tpu_custom_call.1} parent=0
    #allocation5 [shape = 'u8[65536]{0}', space=vmem, size = 0x10000, scoped, tag = 'output window, operand 0, single buffered']
    #allocation6 [shape = 's32[2]{0}', space=sflag, size = 0x8, scoped, tag = 'scoped memory for tpu_custom_call.1']
    %11 = vsyncpa [#allocation6], 0
    loop: start=0, step=1, limit=10
    $region2: #{tpu_custom_call.1} parent=1 // loop_pre_header
      _
    $region3: #{tpu_custom_call.1} parent=1 // loop_header
      %s13 = sphi 0, %s17
      %p14 = scmp.ge.s32.totalorder %s13, 10
      %s20 = sphi 0, %s39
      %s21 = sphi 0, %s35
      %s22 = sphi 0, %s31
      %s23 = sphi 0, %s20
      %s24 = sphi 0, %s21
      %s25 = sphi 0, %s22
      %s26 = sphi 0, %s23
      %s27 = sphi 0, %s24
      %s28 = sphi 0, %s25
      %s52 = sphi 0, %s54
      %s55 = sphi 0, %s52
      %s56 = sphi 0, %s55
      %s72 = sphi 0, %s56
      %s80 = sphi 0, %s82
      %s83 = sphi 0, %s80
      %s84 = sphi 0, %s83
      %s100 = sphi 0, %s84
      %s104 = sphi 0, %s104
      %s106 = sphi 0, %s104
      %s107 = sphi 0, %s106
      %s121 = sphi 0, %s107
      %s125 = sphi 0, %s125
      %s127 = sphi 0, %s125
      %s128 = sphi 0, %s127
      %s142 = sphi 0, %s128
      %s146 = sphi 0, %s146
      %s148 = sphi 0, %s146
      %s149 = sphi 0, %s148
      %s163 = sphi 0, %s149
      %s167 = sphi 0, %s167
      %s169 = sphi 0, %s167
      %s170 = sphi 0, %s169
      %s184 = sphi 0, %s170
      %s190 = sphi 0, %s192
      %s193 = sphi 0, %s190
      %s194 = sphi 0, %s193
      %s210 = sphi 0, %s194
    $region4: #{tpu_custom_call.1} parent=1 // loop_header_branch
      %16 = sbr.rel (%p14) target = $region8
    $region5: #{tpu_custom_call.1} parent=1 // loop_body
      %s18 = ssub.s32 %s13, 1
      %s19 = ssub.s32 %s13, 2
      %s29 = sadd.s32 1, %s22
      %p30 = scmp.ge.s32.totalorder %s29, 1
      %s31 = scalar_select %p30, 0, %s29
      %s32 = sadd.s32 1, %s21
      %s33 = scalar_select %p30, %s32, %s21
      %p34 = scmp.ge.s32.totalorder %s33, 1
      %s35 = scalar_select %p34, 0, %s33
      %s36 = sadd.s32 1, %s20
      %s37 = scalar_select %p34, %s36, %s20
      %p38 = scmp.ge.s32.totalorder %s37, 8
      %s39 = scalar_select %p38, 0, %s37
      %p40 = scmp.eq.s32.totalorder %s20, 0
      %p41 = scmp.eq.s32.totalorder %s21, 0
      %p42 = pnand %p40, %p41
      %p43 = pneg %p42
      %s44 = scalar_select %p43, %s22, 0
      %p45 = scmp.eq.s32.totalorder %s39, 0
      %p46 = scmp.eq.s32.totalorder %s35, 0
      %p47 = pnand %p45, %p46
      %p48 = pneg %p47
      %s49 = scalar_select %p48, %s31, 0
      %s50 = ssub.s32 %s44, %s49
      %p51 = scmp.eq.s32.totalorder %s50, 0
      %s53 = sadd.s32 %s52, 1
      %s54 = scalar_select %p51, %s52, %s53
      %p57 = pneg %p51
      %p58 = scmp.eq.s32.totalorder %s13, 7
      %p59 = por %p57, %p58
      %p60 = scmp.ne.s32.totalorder %s52, %s55
      %p61 = scmp.eq.s32.totalorder %s13, 0
      %p62 = por %p60, %p61
      %p63 = scmp.ne.s32.totalorder %s52, %s55
      %p64 = scmp.eq.s32.totalorder %s18, 7
      %p65 = por %p63, %p64
      %p66 = scmp.ne.s32.totalorder %s55, %s56
      %p67 = scmp.eq.s32.totalorder %s18, 0
      %p68 = por %p66, %p67
      %p69 = scmp.ne.s32.totalorder %s55, %s56
      %p70 = scmp.eq.s32.totalorder %s19, 7
      %p71 = por %p69, %p70
      %p73 = scmp.ne.s32.totalorder %s56, %s72
      %p74 = scmp.eq.s32.totalorder %s19, 0
      %p75 = por %p73, %p74
      %s76 = ssub.s32 %s21, %s35
      %s77 = ssub.s32 %s22, %s31
      %s78 = sor.u32 %s76, %s77
      %p79 = scmp.eq.s32.totalorder %s78, 0
      %s81 = sadd.s32 %s80, 1
      %s82 = scalar_select %p79, %s80, %s81
      %p85 = pneg %p79
      %p86 = scmp.eq.s32.totalorder %s13, 7
      %p87 = por %p85, %p86
      %p88 = scmp.ne.s32.totalorder %s80, %s83
      %p89 = scmp.eq.s32.totalorder %s13, 0
      %p90 = por %p88, %p89
      %p91 = scmp.ne.s32.totalorder %s80, %s83
      %p92 = scmp.eq.s32.totalorder %s18, 7
      %p93 = por %p91, %p92
      %p94 = scmp.ne.s32.totalorder %s83, %s84
      %p95 = scmp.eq.s32.totalorder %s18, 0
      %p96 = por %p94, %p95
      %p97 = scmp.ne.s32.totalorder %s83, %s84
      %p98 = scmp.eq.s32.totalorder %s19, 7
      %p99 = por %p97, %p98
      %p101 = scmp.ne.s32.totalorder %s84, %s100
      %p102 = scmp.eq.s32.totalorder %s19, 0
      %p103 = por %p101, %p102
      %s105 = sadd.s32 %s104, 1
      %p108 = scmp.eq.s32.totalorder %s13, 7
      %p109 = scmp.ne.s32.totalorder %s104, %s106
      %p110 = scmp.eq.s32.totalorder %s13, 0
      %p111 = por %p109, %p110
      %p112 = scmp.ne.s32.totalorder %s104, %s106
      %p113 = scmp.eq.s32.totalorder %s18, 7
      %p114 = por %p112, %p113
      %p115 = scmp.ne.s32.totalorder %s106, %s107
      %p116 = scmp.eq.s32.totalorder %s18, 0
      %p117 = por %p115, %p116
      %p118 = scmp.ne.s32.totalorder %s106, %s107
      %p119 = scmp.eq.s32.totalorder %s19, 7
      %p120 = por %p118, %p119
      %p122 = scmp.ne.s32.totalorder %s107, %s121
      %p123 = scmp.eq.s32.totalorder %s19, 0
      %p124 = por %p122, %p123
      %s126 = sadd.s32 %s125, 1
      %p129 = scmp.eq.s32.totalorder %s13, 7
      %p130 = scmp.ne.s32.totalorder %s125, %s127
      %p131 = scmp.eq.s32.totalorder %s13, 0
      %p132 = por %p130, %p131
      %p133 = scmp.ne.s32.totalorder %s125, %s127
      %p134 = scmp.eq.s32.totalorder %s18, 7
      %p135 = por %p133, %p134
      %p136 = scmp.ne.s32.totalorder %s127, %s128
      %p137 = scmp.eq.s32.totalorder %s18, 0
      %p138 = por %p136, %p137
      %p139 = scmp.ne.s32.totalorder %s127, %s128
      %p140 = scmp.eq.s32.totalorder %s19, 7
      %p141 = por %p139, %p140
      %p143 = scmp.ne.s32.totalorder %s128, %s142
      %p144 = scmp.eq.s32.totalorder %s19, 0
      %p145 = por %p143, %p144
      %s147 = sadd.s32 %s146, 1
      %p150 = scmp.eq.s32.totalorder %s13, 7
      %p151 = scmp.ne.s32.totalorder %s146, %s148
      %p152 = scmp.eq.s32.totalorder %s13, 0
      %p153 = por %p151, %p152
      %p154 = scmp.ne.s32.totalorder %s146, %s148
      %p155 = scmp.eq.s32.totalorder %s18, 7
      %p156 = por %p154, %p155
      %p157 = scmp.ne.s32.totalorder %s148, %s149
      %p158 = scmp.eq.s32.totalorder %s18, 0
      %p159 = por %p157, %p158
      %p160 = scmp.ne.s32.totalorder %s148, %s149
      %p161 = scmp.eq.s32.totalorder %s19, 7
      %p162 = por %p160, %p161
      %p164 = scmp.ne.s32.totalorder %s149, %s163
      %p165 = scmp.eq.s32.totalorder %s19, 0
      %p166 = por %p164, %p165
      %s168 = sadd.s32 %s167, 1
      %p171 = scmp.eq.s32.totalorder %s13, 7
      %p172 = scmp.ne.s32.totalorder %s167, %s169
      %p173 = scmp.eq.s32.totalorder %s13, 0
      %p174 = por %p172, %p173
      %p175 = scmp.ne.s32.totalorder %s167, %s169
      %p176 = scmp.eq.s32.totalorder %s18, 7
      %p177 = por %p175, %p176
      %p178 = scmp.ne.s32.totalorder %s169, %s170
      %p179 = scmp.eq.s32.totalorder %s18, 0
      %p180 = por %p178, %p179
      %p181 = scmp.ne.s32.totalorder %s169, %s170
      %p182 = scmp.eq.s32.totalorder %s19, 7
      %p183 = por %p181, %p182
      %p185 = scmp.ne.s32.totalorder %s170, %s184
      %p186 = scmp.eq.s32.totalorder %s19, 0
      %p187 = por %p185, %p186
      %s188 = ssub.s32 %s21, %s35
      %p189 = scmp.eq.s32.totalorder %s188, 0
      %s191 = sadd.s32 %s190, 1
      %s192 = scalar_select %p189, %s190, %s191
      %p195 = pneg %p189
      %p196 = scmp.eq.s32.totalorder %s13, 7
      %p197 = por %p195, %p196
      %p198 = scmp.ne.s32.totalorder %s190, %s193
      %p199 = scmp.eq.s32.totalorder %s13, 0
      %p200 = por %p198, %p199
      %p201 = scmp.ne.s32.totalorder %s190, %s193
      %p202 = scmp.eq.s32.totalorder %s18, 7
      %p203 = por %p201, %p202
      %p204 = scmp.ne.s32.totalorder %s193, %s194
      %p205 = scmp.eq.s32.totalorder %s18, 0
      %p206 = por %p204, %p205
      %p207 = scmp.ne.s32.totalorder %s193, %s194
      %p208 = scmp.eq.s32.totalorder %s19, 7
      %p209 = por %p207, %p208
      %p211 = scmp.ne.s32.totalorder %s194, %s210
      %p212 = scmp.eq.s32.totalorder %s19, 0
      %p213 = por %p211, %p212
      %p214 = scmp.le.s32.totalorder 1, %s13
      %p215 = scmp.lt.s32.totalorder %s13, 9
      %p216 = pnand %p214, %p215
      %p217 = pneg %p216
      // Predicated region
      $region9: #{tpu_custom_call.1} parent=5 // pred_check
        _
      $region10: #{tpu_custom_call.1} parent=5 // pred_check_branch
        %219 = sbr.rel (%p216) target = $region12
      $region11: #{tpu_custom_call.1} parent=5 // pred_region
        %s220 = ssub.s32 %s13, 1
        // Predicated region
        $region13: #{tpu_custom_call.1} parent=11 // pred_check
          %p221 = pneg %p96
        $region14: #{tpu_custom_call.1} parent=11 // pred_check_branch
          %223 = sbr.rel (%p221) target = $region16
        $region15: #{tpu_custom_call.1} parent=11 // pred_region
          %s224 = smul.u32 16, %s24
          %p225 = scmp.lt.s32.totalorder %s224, 15
          %s226 = scalar_select %p225, %s224, 15
          %p227 = scmp.lt.s32.totalorder %s25, 0
          %s228 = scalar_select %p227, %s25, 0
          %s229 = sadd.s32 %s228, %s226
          %s230 = smul.addr %s229, 4
          %s231 = scalar_lea.vmem %s1, %s230
          %s232 = smul.u32 16, %s24
        $region16: #{tpu_custom_call.1} parent=11 // pred_fallthru
          _
        // Predicated region
        $region17: #{tpu_custom_call.1} parent=11 // pred_check
          %p233 = pneg %p117
        $region18: #{tpu_custom_call.1} parent=11 // pred_check_branch
          %235 = sbr.rel (%p233) target = $region20
        $region19: #{tpu_custom_call.1} parent=11 // pred_region
          _
        $region20: #{tpu_custom_call.1} parent=11 // pred_fallthru
          _
        // Predicated region
        $region21: #{tpu_custom_call.1} parent=11 // pred_check
          %p236 = pneg %p138
        $region22: #{tpu_custom_call.1} parent=11 // pred_check_branch
          %238 = sbr.rel (%p236) target = $region24
        $region23: #{tpu_custom_call.1} parent=11 // pred_region
          _
        $region24: #{tpu_custom_call.1} parent=11 // pred_fallthru
          _
        // Predicated region
        $region25: #{tpu_custom_call.1} parent=11 // pred_check
          %p239 = pneg %p159
        $region26: #{tpu_custom_call.1} parent=11 // pred_check_branch
          %241 = sbr.rel (%p239) target = $region28
        $region27: #{tpu_custom_call.1} parent=11 // pred_region
          _
        $region28: #{tpu_custom_call.1} parent=11 // pred_fallthru
          _
        // Predicated region
        $region29: #{tpu_custom_call.1} parent=11 // pred_check
          %p242 = pneg %p180
        $region30: #{tpu_custom_call.1} parent=11 // pred_check_branch
          %244 = sbr.rel (%p242) target = $region32
        $region31: #{tpu_custom_call.1} parent=11 // pred_region
          _
        $region32: #{tpu_custom_call.1} parent=11 // pred_fallthru
          _
      $region12: #{tpu_custom_call.1} parent=5 // pred_fallthru
        _
      %p245 = scmp.lt.s32.totalorder %s13, 8
      // Predicated region
      $region33: #{tpu_custom_call.1} parent=5 // pred_check
        %p246 = pneg %p245
      $region34: #{tpu_custom_call.1} parent=5 // pred_check_branch
        %248 = sbr.rel (%p246) target = $region36
      $region35: #{tpu_custom_call.1} parent=5 // pred_region
        // Predicated region
        $region37: #{tpu_custom_call.1} parent=35 // pred_check
          %p249 = pneg %p62
        $region38: #{tpu_custom_call.1} parent=35 // pred_check_branch
          %251 = sbr.rel (%p249) target = $region40
        $region39: #{tpu_custom_call.1} parent=35 // pred_region
          %p252 = scmp.eq.s32.totalorder %s20, 0
          %p253 = scmp.eq.s32.totalorder %s21, 0
          %p254 = pnand %p252, %p253
          %p255 = pneg %p254
          %s256 = scalar_select %p255, %s22, 0
          %s257 = smul.u32 16, %s256
          %p258 = scmp.lt.s32.totalorder %s257, 15
          %s259 = scalar_select %p258, %s257, 15
          %s260 = smul.addr %s259, 8
          %s261 = scalar_lea.vmem %s0, %s260
          %p262 = scmp.eq.s32.totalorder %s20, 0
          %p263 = scmp.eq.s32.totalorder %s21, 0
          %p264 = pnand %p262, %p263
          %p265 = pneg %p264
          %s266 = scalar_select %p265, %s22, 0
          %s267 = smul.u32 16, %s266
        $region40: #{tpu_custom_call.1} parent=35 // pred_fallthru
          _
      $region36: #{tpu_custom_call.1} parent=5 // pred_fallthru
        _
      %p268 = scmp.le.s32.totalorder 1, %s13
      %p269 = scmp.lt.s32.totalorder %s13, 9
      %p270 = pnand %p268, %p269
      %p271 = pneg %p270
      // Predicated region
      $region41: #{tpu_custom_call.1} parent=5 // pred_check
        _
      $region42: #{tpu_custom_call.1} parent=5 // pred_check_branch
        %273 = sbr.rel (%p270) target = $region44
      $region43: #{tpu_custom_call.1} parent=5 // pred_region
        %s274 = ssub.s32 %s13, 1
        %p275 = scmp.eq.s32.totalorder %s23, 0
        %p276 = scmp.eq.s32.totalorder %s24, 0
        %p277 = pnand %p275, %p276
        %p278 = pneg %p277
        %s279 = scalar_select %p278, %s25, 0
        %s280 = smul.u32 16, %s279
        %p281 = scmp.lt.s32.totalorder %s280, 15
        %s282 = scalar_select %p281, %s280, 15
        %s283 = smul.addr %s282, 8
        %s284 = scalar_lea.vmem %s0, %s283
        %p285 = pneg %p68
        %p286 = pneg %p65
        %s287 = smul.u32 16, %s24
        %p288 = scmp.lt.s32.totalorder %s287, 15
        %s289 = scalar_select %p288, %s287, 15
        %p290 = scmp.lt.s32.totalorder %s25, 0
        %s291 = scalar_select %p290, %s25, 0
        %s292 = sadd.s32 %s291, %s289
        %s293 = smul.addr %s292, 4
        %s294 = scalar_lea.vmem %s1, %s293
        %p295 = pneg %p96
        %p296 = pneg %p93
        %p297 = pneg %p117
        %p298 = pneg %p114
        %p299 = pneg %p138
        %p300 = pneg %p135
        %p301 = pneg %p159
        %p302 = pneg %p156
        %p303 = pneg %p180
        %p304 = pneg %p177
        %p305 = pneg %p206
        %p306 = pneg %p203
        %p307 = scmp.eq.s32.totalorder %s23, 0
        %p308 = scmp.eq.s32.totalorder %s24, 0
        %p309 = pnand %p307, %p308
        %p310 = pneg %p309
        %s311 = scalar_select %p310, %s25, 0
        %s312 = smul.u32 16, %s311
        %p313 = scmp.lt.s32.totalorder %s312, 15
        %s314 = scalar_select %p313, %s312, 15
        %s315 = smul.addr %s314, 8
        %s316 = scalar_lea.vmem %s0, %s315
        %p317 = scmp.eq.s32.totalorder %s23, 0
        %p318 = scmp.eq.s32.totalorder %s24, 0
        %p319 = pnand %p317, %p318
        %p320 = pneg %p319
        %s321 = scalar_select %p320, %s25, 0
        %s322 = smul.u32 16, %s321
        %s323 = smul.u32 16, %s24
        %p324 = scmp.lt.s32.totalorder %s323, 15
        %s325 = scalar_select %p324, %s323, 15
        %p326 = scmp.lt.s32.totalorder %s25, 0
        %s327 = scalar_select %p326, %s25, 0
        %s328 = sadd.s32 %s327, %s325
        %s329 = smul.addr %s328, 4
        %s330 = scalar_lea.vmem %s1, %s329
        %s331 = smul.u32 16, %s24
        %s332 = smul.u32 16, %s24
        %p334 = scmp.eq.s32.totalorder %s25, 0
        // Predicated region
        $region45: #{tpu_custom_call.1} parent=43 // pred_check
          %p335 = pneg %p334
        $region46: #{tpu_custom_call.1} parent=43 // pred_check_branch
          %337 = sbr.rel (%p335) target = $region48
        $region47: #{tpu_custom_call.1} parent=43 // pred_region
          %338 = vst [vmem:[#allocation4] sm:$0xff] 0.0
          %339 = vst [vmem:[#allocation4 + $0x8] sm:$0xff] 0.0
          %340 = vst [vmem:[#allocation4 + $0x10] sm:$0xff] 0.0
          %341 = vst [vmem:[#allocation4 + $0x18] sm:$0xff] 0.0
          %342 = vst [vmem:[#allocation4 + $0x20] sm:$0xff] 0.0
          %343 = vst [vmem:[#allocation4 + $0x28] sm:$0xff] 0.0
          %344 = vst [vmem:[#allocation4 + $0x30] sm:$0xff] 0.0
          %345 = vst [vmem:[#allocation4 + $0x38] sm:$0xff] 0.0
          %346 = vst [vmem:[#allocation4 + $0x40] sm:$0xff] 0.0
          %347 = vst [vmem:[#allocation4 + $0x48] sm:$0xff] 0.0
          %348 = vst [vmem:[#allocation4 + $0x50] sm:$0xff] 0.0
          %349 = vst [vmem:[#allocation4 + $0x58] sm:$0xff] 0.0
          %350 = vst [vmem:[#allocation4 + $0x60] sm:$0xff] 0.0
          %351 = vst [vmem:[#allocation4 + $0x68] sm:$0xff] 0.0
          %352 = vst [vmem:[#allocation4 + $0x70] sm:$0xff] 0.0
          %353 = vst [vmem:[#allocation4 + $0x78] sm:$0xff] 0.0
        $region48: #{tpu_custom_call.1} parent=43 // pred_fallthru
          _
        %p354 = scmp.eq.s32.totalorder %s23, 0
        %p355 = scmp.eq.s32.totalorder %s24, 0
        %p356 = pnand %p354, %p355
        %p357 = pneg %p356
        // Predicated region
        $region49: #{tpu_custom_call.1} parent=43 // pred_check
          _
        $region50: #{tpu_custom_call.1} parent=43 // pred_check_branch
          %359 = sbr.rel (%p356) target = $region52
        $region51: #{tpu_custom_call.1} parent=43 // pred_region
          %v360 = vld [vmem:[%s316] sm:$0xff]
          %v361 = vld [vmem:[%s316 + $0x8] sm:$0xff]
          %v362 = vld [vmem:[%s316 + $0x10] sm:$0xff]
          %v363 = vld [vmem:[%s316 + $0x18] sm:$0xff]
          %v364 = vld [vmem:[%s316 + $0x20] sm:$0xff]
          %v365 = vld [vmem:[%s316 + $0x28] sm:$0xff]
          %v366 = vld [vmem:[%s316 + $0x30] sm:$0xff]
          %v367 = vld [vmem:[%s316 + $0x38] sm:$0xff]
          %v368 = vld [vmem:[%s316 + $0x40] sm:$0xff]
          %v369 = vld [vmem:[%s316 + $0x48] sm:$0xff]
          %v370 = vld [vmem:[%s316 + $0x50] sm:$0xff]
          %v371 = vld [vmem:[%s316 + $0x58] sm:$0xff]
          %v372 = vld [vmem:[%s316 + $0x60] sm:$0xff]
          %v373 = vld [vmem:[%s316 + $0x68] sm:$0xff]
          %v374 = vld [vmem:[%s316 + $0x70] sm:$0xff]
          %v375 = vld [vmem:[%s316 + $0x78] sm:$0xff]
          %v376 = vld [vmem:[%s2] sm:$0xff]
          %v377 = vld [vmem:[%s2 + $0x8] sm:$0xff]
          %v378 = vld [vmem:[%s2 + $0x10] sm:$0xff]
          %v379 = vld [vmem:[%s2 + $0x18] sm:$0xff]
          %v380 = vld [vmem:[%s2 + $0x20] sm:$0xff]
          %v381 = vld [vmem:[%s2 + $0x28] sm:$0xff]
          %v382 = vld [vmem:[%s2 + $0x30] sm:$0xff]
          %v383 = vld [vmem:[%s2 + $0x38] sm:$0xff]
          %v384 = vld [vmem:[%s3] sm:$0x1]
          %v386 = vlaneseq
          %v387 = vshrl.u32 %v386, 7
          %v388 = vsub.s32 0, %v387
          %v389 = vrot.slane %v384, %v388
          %vm391 = vcmask 523264
          %v393 = vsel %vm391, %v360, 0
          %v396 = vsel %vm391, %v361, 0
          %v399 = vsel %vm391, %v362, 0
          %v402 = vsel %vm391, %v363, 0
          %v405 = vsel %vm391, %v364, 0
          %v408 = vsel %vm391, %v365, 0
          %v411 = vsel %vm391, %v366, 0
          %v414 = vsel %vm391, %v367, 0
          %v417 = vsel %vm391, %v368, 0
          %v420 = vsel %vm391, %v369, 0
          %v423 = vsel %vm391, %v370, 0
          %v426 = vsel %vm391, %v371, 0
          %v429 = vsel %vm391, %v372, 0
          %v432 = vsel %vm391, %v373, 0
          %v435 = vsel %vm391, %v374, 0
          %v438 = vsel %vm391, %v375, 0
          %440 = vmatprep.subr.mxu0 0.0
          %441 = vmatpush1.msra.mxu0 %v376
          %442 = vmatprep.subr.mxu0 0.0
          %443 = vmatpush1.msra.mxu0 %v377
          %444 = vmatprep.subr.mxu0 0.0
          %445 = vmatpush1.msra.mxu0 %v378
          %446 = vmatprep.subr.mxu0 0.0
          %447 = vmatpush1.msra.mxu0 %v379
          %448 = vmatprep.subr.mxu0 0.0
          %449 = vmatpush1.msra.mxu0 %v380
          %450 = vmatprep.subr.mxu0 0.0
          %451 = vmatpush1.msra.mxu0 %v381
          %452 = vmatprep.subr.mxu0 0.0
          %453 = vmatpush1.msra.mxu0 %v382
          %454 = vmatprep.subr.mxu0 0.0
          %455 = vmatpush1.msra.mxu0 %v383
          %456 = vmatprep.subr.mxu0 0.0
          %457 = vmatpush1.msra.mxu0 0.0
          %458 = vmatprep.subr.mxu0 0.0
          %459 = vmatpush1.msra.mxu0 0.0
          %460 = vmatprep.subr.mxu0 0.0
          %461 = vmatpush1.msra.mxu0 0.0
          %462 = vmatprep.subr.mxu0 0.0
          %463 = vmatpush1.msra.mxu0 0.0
          %464 = vmatprep.subr.mxu0 0.0
          %465 = vmatpush1.msra.mxu0 0.0
          %466 = vmatprep.subr.mxu0 0.0
          %467 = vmatpush1.msra.mxu0 0.0
          %468 = vmatprep.subr.mxu0 0.0
          %469 = vmatpush1.msra.mxu0 0.0
          %470 = vmatprep.subr.mxu0 0.0
          %471 = vmatpush1.msra.mxu0 0.0
          %472 = vmatprep.subr.mxu0 0.0
          %473 = vmatpush1.msra.mxu0 0.0
          %474 = vmatprep.subr.mxu0 0.0
          %475 = vmatpush1.msra.mxu0 0.0
          %476 = vmatprep.subr.mxu0 0.0
          %477 = vmatpush1.msra.mxu0 0.0
          %478 = vmatprep.subr.mxu0 0.0
          %479 = vmatpush1.msra.mxu0 0.0
          %480 = vmatprep.subr.mxu0 0.0
          %481 = vmatpush1.msra.mxu0 0.0
          %482 = vmatprep.subr.mxu0 0.0
          %483 = vmatpush1.msra.mxu0 0.0
          %484 = vmatprep.subr.mxu0 0.0
          %485 = vmatpush1.msra.mxu0 0.0
          %486 = vmatprep.subr.mxu0 0.0
          %487 = vmatpush1.msra.mxu0 0.0
          %488 = vmatprep.subr.mxu0 0.0
          %489 = vmatpush1.msra.mxu0 0.0
          %490 = vmatprep.subr.mxu0 0.0
          %491 = vmatpush1.msra.mxu0 0.0
          %492 = vmatprep.subr.mxu0 0.0
          %493 = vmatpush1.msra.mxu0 0.0
          %494 = vmatprep.subr.mxu0 0.0
          %495 = vmatpush1.msra.mxu0 0.0
          %496 = vmatprep.subr.mxu0 0.0
          %497 = vmatpush1.msra.mxu0 0.0
          %498 = vmatprep.subr.mxu0 0.0
          %499 = vmatpush1.msra.mxu0 0.0
          %500 = vmatprep.subr.mxu0 0.0
          %501 = vmatpush1.msra.mxu0 0.0
          %502 = vmatprep.subr.mxu0 0.0
          %503 = vmatpush1.msra.mxu0 0.0
          %504 = vmatprep.mubr.f32.mxu0 0.0
          %505 = vmatmul.mubr.f32.gmra.mrb[0].mxu0 %v393
          %v506 = vpop.f32.mrb[0].mxu0
          %v507 = vadd.f32 %v389, %v506
          %v508 = vpop.f32.mrb[0].mxu0
          %509 = vmatprep.mubr.f32.mxu0 0.0
          %510 = vmatmul.mubr.f32.gmra.mrb[0].mxu0 %v396
          %v511 = vpop.f32.mrb[0].mxu0
          %v512 = vadd.f32 %v389, %v511
          %v513 = vpop.f32.mrb[0].mxu0
          %514 = vmatprep.mubr.f32.mxu0 0.0
          %515 = vmatmul.mubr.f32.gmra.mrb[0].mxu0 %v399
          %v516 = vpop.f32.mrb[0].mxu0
          %v517 = vadd.f32 %v389, %v516
          %v518 = vpop.f32.mrb[0].mxu0
          %519 = vmatprep.mubr.f32.mxu0 0.0
          %520 = vmatmul.mubr.f32.gmra.mrb[0].mxu0 %v402
          %v521 = vpop.f32.mrb[0].mxu0
          %v522 = vadd.f32 %v389, %v521
          %v523 = vpop.f32.mrb[0].mxu0
          %524 = vmatprep.mubr.f32.mxu0 0.0
          %525 = vmatmul.mubr.f32.gmra.mrb[0].mxu0 %v405
          %v526 = vpop.f32.mrb[0].mxu0
          %v527 = vadd.f32 %v389, %v526
          %v528 = vpop.f32.mrb[0].mxu0
          %529 = vmatprep.mubr.f32.mxu0 0.0
          %530 = vmatmul.mubr.f32.gmra.mrb[0].mxu0 %v408
          %v531 = vpop.f32.mrb[0].mxu0
          %v532 = vadd.f32 %v389, %v531
          %v533 = vpop.f32.mrb[0].mxu0
          %534 = vmatprep.mubr.f32.mxu0 0.0
          %535 = vmatmul.mubr.f32.gmra.mrb[0].mxu0 %v411
          %v536 = vpop.f32.mrb[0].mxu0
          %v537 = vadd.f32 %v389, %v536
          %v538 = vpop.f32.mrb[0].mxu0
          %539 = vmatprep.mubr.f32.mxu0 0.0
          %540 = vmatmul.mubr.f32.gmra.mrb[0].mxu0 %v414
          %v541 = vpop.f32.mrb[0].mxu0
          %v542 = vadd.f32 %v389, %v541
          %v543 = vpop.f32.mrb[0].mxu0
          %544 = vmatprep.mubr.f32.mxu0 0.0
          %545 = vmatmul.mubr.f32.gmra.mrb[0].mxu0 %v417
          %v546 = vpop.f32.mrb[0].mxu0
          %v547 = vadd.f32 %v389, %v546
          %v548 = vpop.f32.mrb[0].mxu0
          %549 = vmatprep.mubr.f32.mxu0 0.0
          %550 = vmatmul.mubr.f32.gmra.mrb[0].mxu0 %v420
          %v551 = vpop.f32.mrb[0].mxu0
          %v552 = vadd.f32 %v389, %v551
          %v553 = vpop.f32.mrb[0].mxu0
          %554 = vmatprep.mubr.f32.mxu0 0.0
          %555 = vmatmul.mubr.f32.gmra.mrb[0].mxu0 %v423
          %v556 = vpop.f32.mrb[0].mxu0
          %v557 = vadd.f32 %v389, %v556
          %v558 = vpop.f32.mrb[0].mxu0
          %559 = vmatprep.mubr.f32.mxu0 0.0
          %560 = vmatmul.mubr.f32.gmra.mrb[0].mxu0 %v426
          %v561 = vpop.f32.mrb[0].mxu0
          %v562 = vadd.f32 %v389, %v561
          %v563 = vpop.f32.mrb[0].mxu0
          %564 = vmatprep.mubr.f32.mxu0 0.0
          %565 = vmatmul.mubr.f32.gmra.mrb[0].mxu0 %v429
          %v566 = vpop.f32.mrb[0].mxu0
          %v567 = vadd.f32 %v389, %v566
          %v568 = vpop.f32.mrb[0].mxu0
          %569 = vmatprep.mubr.f32.mxu0 0.0
          %570 = vmatmul.mubr.f32.gmra.mrb[0].mxu0 %v432
          %v571 = vpop.f32.mrb[0].mxu0
          %v572 = vadd.f32 %v389, %v571
          %v573 = vpop.f32.mrb[0].mxu0
          %574 = vmatprep.mubr.f32.mxu0 0.0
          %575 = vmatmul.mubr.f32.gmra.mrb[0].mxu0 %v435
          %v576 = vpop.f32.mrb[0].mxu0
          %v577 = vadd.f32 %v389, %v576
          %v578 = vpop.f32.mrb[0].mxu0
          %579 = vmatprep.mubr.f32.mxu0 0.0
          %580 = vmatmul.mubr.f32.gmra.mrb[0].mxu0 %v438
          %v581 = vpop.f32.mrb[0].mxu0
          %v582 = vadd.f32 %v389, %v581
          %v583 = vpop.f32.mrb[0].mxu0
          %584 = vdwg.mxu0
          %v585 = vmax.f32 %v507, 0.0
          %v586 = vmax.f32 %v512, 0.0
          %v587 = vmax.f32 %v517, 0.0
          %v588 = vmax.f32 %v522, 0.0
          %v589 = vmax.f32 %v527, 0.0
          %v590 = vmax.f32 %v532, 0.0
          %v591 = vmax.f32 %v537, 0.0
          %v592 = vmax.f32 %v542, 0.0
          %v593 = vmax.f32 %v547, 0.0
          %v594 = vmax.f32 %v552, 0.0
          %v595 = vmax.f32 %v557, 0.0
          %v596 = vmax.f32 %v562, 0.0
          %v597 = vmax.f32 %v567, 0.0
          %v598 = vmax.f32 %v572, 0.0
          %v599 = vmax.f32 %v577, 0.0
          %v600 = vmax.f32 %v582, 0.0
          %v601 = vld [vmem:[%s4] sm:$0xff]
          %v602 = vld [vmem:[%s4 + $0x8] sm:$0xff]
          %v603 = vld [vmem:[%s4 + $0x10] sm:$0xff]
          %v604 = vld [vmem:[%s4 + $0x18] sm:$0xff]
          %v605 = vld [vmem:[%s5] sm:$0x1]
          %v607 = vlaneseq
          %v608 = vshrl.u32 %v607, 7
          %v609 = vsub.s32 0, %v608
          %v610 = vrot.slane %v605, %v609
          %vm612 = vcmask 261120
          %v614 = vsel %vm612, %v585, 0
          %v617 = vsel %vm612, %v586, 0
          %v620 = vsel %vm612, %v587, 0
          %v623 = vsel %vm612, %v588, 0
          %v626 = vsel %vm612, %v589, 0
          %v629 = vsel %vm612, %v590, 0
          %v632 = vsel %vm612, %v591, 0
          %v635 = vsel %vm612, %v592, 0
          %v638 = vsel %vm612, %v593, 0
          %v641 = vsel %vm612, %v594, 0
          %v644 = vsel %vm612, %v595, 0
          %v647 = vsel %vm612, %v596, 0
          %v650 = vsel %vm612, %v597, 0
          %v653 = vsel %vm612, %v598, 0
          %v656 = vsel %vm612, %v599, 0
          %v659 = vsel %vm612, %v600, 0
          %661 = vmatprep.subr.mxu0 0.0
          %662 = vmatpush1.msra.mxu0 %v601
          %663 = vmatprep.subr.mxu0 0.0
          %664 = vmatpush1.msra.mxu0 %v602
          %665 = vmatprep.subr.mxu0 0.0
          %666 = vmatpush1.msra.mxu0 %v603
          %667 = vmatprep.subr.mxu0 0.0
          %668 = vmatpush1.msra.mxu0 %v604
          %669 = vmatprep.subr.mxu0 0.0
          %670 = vmatpush1.msra.mxu0 0.0
          %671 = vmatprep.subr.mxu0 0.0
          %672 = vmatpush1.msra.mxu0 0.0
          %673 = vmatprep.subr.mxu0 0.0
          %674 = vmatpush1.msra.mxu0 0.0
          %675 = vmatprep.subr.mxu0 0.0
          %676 = vmatpush1.msra.mxu0 0.0
          %677 = vmatprep.subr.mxu0 0.0
          %678 = vmatpush1.msra.mxu0 0.0
          %679 = vmatprep.subr.mxu0 0.0
          %680 = vmatpush1.msra.mxu0 0.0
          %681 = vmatprep.subr.mxu0 0.0
          %682 = vmatpush1.msra.mxu0 0.0
          %683 = vmatprep.subr.mxu0 0.0
          %684 = vmatpush1.msra.mxu0 0.0
          %685 = vmatprep.subr.mxu0 0.0
          %686 = vmatpush1.msra.mxu0 0.0
          %687 = vmatprep.subr.mxu0 0.0
          %688 = vmatpush1.msra.mxu0 0.0
          %689 = vmatprep.subr.mxu0 0.0
          %690 = vmatpush1.msra.mxu0 0.0
          %691 = vmatprep.subr.mxu0 0.0
          %692 = vmatpush1.msra.mxu0 0.0
          %693 = vmatprep.subr.mxu0 0.0
          %694 = vmatpush1.msra.mxu0 0.0
          %695 = vmatprep.subr.mxu0 0.0
          %696 = vmatpush1.msra.mxu0 0.0
          %697 = vmatprep.subr.mxu0 0.0
          %698 = vmatpush1.msra.mxu0 0.0
          %699 = vmatprep.subr.mxu0 0.0
          %700 = vmatpush1.msra.mxu0 0.0
          %701 = vmatprep.subr.mxu0 0.0
          %702 = vmatpush1.msra.mxu0 0.0
          %703 = vmatprep.subr.mxu0 0.0
          %704 = vmatpush1.msra.mxu0 0.0
          %705 = vmatprep.subr.mxu0 0.0
          %706 = vmatpush1.msra.mxu0 0.0
          %707 = vmatprep.subr.mxu0 0.0
          %708 = vmatpush1.msra.mxu0 0.0
          %709 = vmatprep.subr.mxu0 0.0
          %710 = vmatpush1.msra.mxu0 0.0
          %711 = vmatprep.subr.mxu0 0.0
          %712 = vmatpush1.msra.mxu0 0.0
          %713 = vmatprep.subr.mxu0 0.0
          %714 = vmatpush1.msra.mxu0 0.0
          %715 = vmatprep.subr.mxu0 0.0
          %716 = vmatpush1.msra.mxu0 0.0
          %717 = vmatprep.subr.mxu0 0.0
          %718 = vmatpush1.msra.mxu0 0.0
          %719 = vmatprep.subr.mxu0 0.0
          %720 = vmatpush1.msra.mxu0 0.0
          %721 = vmatprep.subr.mxu0 0.0
          %722 = vmatpush1.msra.mxu0 0.0
          %723 = vmatprep.subr.mxu0 0.0
          %724 = vmatpush1.msra.mxu0 0.0
          %725 = vmatprep.mubr.f32.mxu0 0.0
          %726 = vmatmul.mubr.f32.gmra.mrb[0].mxu0 %v614
          %v727 = vpop.f32.mrb[0].mxu0
          %v728 = vadd.f32 %v610, %v727
          %v729 = vpop.f32.mrb[0].mxu0
          %730 = vmatprep.mubr.f32.mxu0 0.0
          %731 = vmatmul.mubr.f32.gmra.mrb[0].mxu0 %v617
          %v732 = vpop.f32.mrb[0].mxu0
          %v733 = vadd.f32 %v610, %v732
          %v734 = vpop.f32.mrb[0].mxu0
          %735 = vmatprep.mubr.f32.mxu0 0.0
          %736 = vmatmul.mubr.f32.gmra.mrb[0].mxu0 %v620
          %v737 = vpop.f32.mrb[0].mxu0
          %v738 = vadd.f32 %v610, %v737
          %v739 = vpop.f32.mrb[0].mxu0
          %740 = vmatprep.mubr.f32.mxu0 0.0
          %741 = vmatmul.mubr.f32.gmra.mrb[0].mxu0 %v623
          %v742 = vpop.f32.mrb[0].mxu0
          %v743 = vadd.f32 %v610, %v742
          %v744 = vpop.f32.mrb[0].mxu0
          %745 = vmatprep.mubr.f32.mxu0 0.0
          %746 = vmatmul.mubr.f32.gmra.mrb[0].mxu0 %v626
          %v747 = vpop.f32.mrb[0].mxu0
          %v748 = vadd.f32 %v610, %v747
          %v749 = vpop.f32.mrb[0].mxu0
          %750 = vmatprep.mubr.f32.mxu0 0.0
          %751 = vmatmul.mubr.f32.gmra.mrb[0].mxu0 %v629
          %v752 = vpop.f32.mrb[0].mxu0
          %v753 = vadd.f32 %v610, %v752
          %v754 = vpop.f32.mrb[0].mxu0
          %755 = vmatprep.mubr.f32.mxu0 0.0
          %756 = vmatmul.mubr.f32.gmra.mrb[0].mxu0 %v632
          %v757 = vpop.f32.mrb[0].mxu0
          %v758 = vadd.f32 %v610, %v757
          %v759 = vpop.f32.mrb[0].mxu0
          %760 = vmatprep.mubr.f32.mxu0 0.0
          %761 = vmatmul.mubr.f32.gmra.mrb[0].mxu0 %v635
          %v762 = vpop.f32.mrb[0].mxu0
          %v763 = vadd.f32 %v610, %v762
          %v764 = vpop.f32.mrb[0].mxu0
          %765 = vmatprep.mubr.f32.mxu0 0.0
          %766 = vmatmul.mubr.f32.gmra.mrb[0].mxu0 %v638
          %v767 = vpop.f32.mrb[0].mxu0
          %v768 = vadd.f32 %v610, %v767
          %v769 = vpop.f32.mrb[0].mxu0
          %770 = vmatprep.mubr.f32.mxu0 0.0
          %771 = vmatmul.mubr.f32.gmra.mrb[0].mxu0 %v641
          %v772 = vpop.f32.mrb[0].mxu0
          %v773 = vadd.f32 %v610, %v772
          %v774 = vpop.f32.mrb[0].mxu0
          %775 = vmatprep.mubr.f32.mxu0 0.0
          %776 = vmatmul.mubr.f32.gmra.mrb[0].mxu0 %v644
          %v777 = vpop.f32.mrb[0].mxu0
          %v778 = vadd.f32 %v610, %v777
          %v779 = vpop.f32.mrb[0].mxu0
          %780 = vmatprep.mubr.f32.mxu0 0.0
          %781 = vmatmul.mubr.f32.gmra.mrb[0].mxu0 %v647
          %v782 = vpop.f32.mrb[0].mxu0
          %v783 = vadd.f32 %v610, %v782
          %v784 = vpop.f32.mrb[0].mxu0
          %785 = vmatprep.mubr.f32.mxu0 0.0
          %786 = vmatmul.mubr.f32.gmra.mrb[0].mxu0 %v650
          %v787 = vpop.f32.mrb[0].mxu0
          %v788 = vadd.f32 %v610, %v787
          %v789 = vpop.f32.mrb[0].mxu0
          %790 = vmatprep.mubr.f32.mxu0 0.0
          %791 = vmatmul.mubr.f32.gmra.mrb[0].mxu0 %v653
          %v792 = vpop.f32.mrb[0].mxu0
          %v793 = vadd.f32 %v610, %v792
          %v794 = vpop.f32.mrb[0].mxu0
          %795 = vmatprep.mubr.f32.mxu0 0.0
          %796 = vmatmul.mubr.f32.gmra.mrb[0].mxu0 %v656
          %v797 = vpop.f32.mrb[0].mxu0
          %v798 = vadd.f32 %v610, %v797
          %v799 = vpop.f32.mrb[0].mxu0
          %800 = vmatprep.mubr.f32.mxu0 0.0
          %801 = vmatmul.mubr.f32.gmra.mrb[0].mxu0 %v659
          %v802 = vpop.f32.mrb[0].mxu0
          %v803 = vadd.f32 %v610, %v802
          %v804 = vpop.f32.mrb[0].mxu0
          %805 = vdwg.mxu0
          %s806 = smul.u32 %s25, 128
          %s807 = scalar_lea.vmem [#allocation3], %s806
          %808 = vst [vmem:[%s807] sm:$0xff] %v728
          %809 = vst [vmem:[%s807 + $0x8] sm:$0xff] %v733
          %810 = vst [vmem:[%s807 + $0x10] sm:$0xff] %v738
          %811 = vst [vmem:[%s807 + $0x18] sm:$0xff] %v743
          %812 = vst [vmem:[%s807 + $0x20] sm:$0xff] %v748
          %813 = vst [vmem:[%s807 + $0x28] sm:$0xff] %v753
          %814 = vst [vmem:[%s807 + $0x30] sm:$0xff] %v758
          %815 = vst [vmem:[%s807 + $0x38] sm:$0xff] %v763
          %816 = vst [vmem:[%s807 + $0x40] sm:$0xff] %v768
          %817 = vst [vmem:[%s807 + $0x48] sm:$0xff] %v773
          %818 = vst [vmem:[%s807 + $0x50] sm:$0xff] %v778
          %819 = vst [vmem:[%s807 + $0x58] sm:$0xff] %v783
          %820 = vst [vmem:[%s807 + $0x60] sm:$0xff] %v788
          %821 = vst [vmem:[%s807 + $0x68] sm:$0xff] %v793
          %822 = vst [vmem:[%s807 + $0x70] sm:$0xff] %v798
          %823 = vst [vmem:[%s807 + $0x78] sm:$0xff] %v803
          %v824 = vpack.c.bf16 %v733, %v728
          %v825 = vpack.c.bf16 %v743, %v738
          %v826 = vpack.c.bf16 %v753, %v748
          %v827 = vpack.c.bf16 %v763, %v758
          %v828 = vpack.c.bf16 %v773, %v768
          %v829 = vpack.c.bf16 %v783, %v778
          %v830 = vpack.c.bf16 %v793, %v788
          %v831 = vpack.c.bf16 %v803, %v798
          %s832 = smul.u32 %s25, 8
          %s833 = smul.addr %s832, 8
          %s834 = scalar_lea.vmem [#allocation2], %s833
          %835 = vst [vmem:[%s834] sm:$0xff] %v824
          %836 = vst [vmem:[%s834 + $0x8] sm:$0xff] %v825
          %837 = vst [vmem:[%s834 + $0x10] sm:$0xff] %v826
          %838 = vst [vmem:[%s834 + $0x18] sm:$0xff] %v827
          %839 = vst [vmem:[%s834 + $0x20] sm:$0xff] %v828
          %840 = vst [vmem:[%s834 + $0x28] sm:$0xff] %v829
          %841 = vst [vmem:[%s834 + $0x30] sm:$0xff] %v830
          %842 = vst [vmem:[%s834 + $0x38] sm:$0xff] %v831
        $region52: #{tpu_custom_call.1} parent=43 // pred_fallthru
          _
        %p843 = scmp.lt.s32.totalorder %s23, 0
        %s844 = ssub.s32 0, %s23
        %s845 = scalar_select %p843, %s844, %s23
        %s846 = sand.u32 %s845, 1
        %s847 = ssub.s32 0, %s846
        %s848 = scalar_select %p843, %s847, %s846
        %p849 = scmp.ne.s32.totalorder %s848, 0
        %p850 = scmp.lt.s32.totalorder %s848, 0
        %p851 = pnand %p850, %p849
        %p852 = pneg %p851
        %s853 = sadd.s32 %s848, 2
        %s854 = scalar_select %p852, %s853, %s848
        %s855 = sadd.s32 %s23, 1
        %p856 = scmp.lt.s32.totalorder %s855, 0
        %s857 = ssub.s32 0, %s855
        %s858 = scalar_select %p856, %s857, %s855
        %s859 = sand.u32 %s858, 1
        %s860 = ssub.s32 0, %s859
        %s861 = scalar_select %p856, %s860, %s859
        %p862 = scmp.ne.s32.totalorder %s861, 0
        %p863 = scmp.lt.s32.totalorder %s861, 0
        %p864 = pnand %p863, %p862
        %p865 = pneg %p864
        %s866 = sadd.s32 %s861, 2
        %s867 = scalar_select %p865, %s866, %s861
        %v868 = vld [vmem:[#allocation4] sm:$0xff]
        %v869 = vld [vmem:[#allocation4 + $0x8] sm:$0xff]
        %v870 = vld [vmem:[#allocation4 + $0x10] sm:$0xff]
        %v871 = vld [vmem:[#allocation4 + $0x18] sm:$0xff]
        %v872 = vld [vmem:[#allocation4 + $0x20] sm:$0xff]
        %v873 = vld [vmem:[#allocation4 + $0x28] sm:$0xff]
        %v874 = vld [vmem:[#allocation4 + $0x30] sm:$0xff]
        %v875 = vld [vmem:[#allocation4 + $0x38] sm:$0xff]
        %v876 = vld [vmem:[#allocation4 + $0x40] sm:$0xff]
        %v877 = vld [vmem:[#allocation4 + $0x48] sm:$0xff]
        %v878 = vld [vmem:[#allocation4 + $0x50] sm:$0xff]
        %v879 = vld [vmem:[#allocation4 + $0x58] sm:$0xff]
        %v880 = vld [vmem:[#allocation4 + $0x60] sm:$0xff]
        %v881 = vld [vmem:[#allocation4 + $0x68] sm:$0xff]
        %v882 = vld [vmem:[#allocation4 + $0x70] sm:$0xff]
        %v883 = vld [vmem:[#allocation4 + $0x78] sm:$0xff]
        %v884 = vld [vmem:[%s330] sm:$0xf]
        %v885 = vld [vmem:[%s330 + $0x4] sm:$0xf]
        %v886 = vld [vmem:[%s330 + $0x8] sm:$0xf]
        %v887 = vld [vmem:[%s330 + $0xc] sm:$0xf]
        %v888 = vld [vmem:[%s330 + $0x10] sm:$0xf]
        %v889 = vld [vmem:[%s330 + $0x14] sm:$0xf]
        %v890 = vld [vmem:[%s330 + $0x18] sm:$0xf]
        %v891 = vld [vmem:[%s330 + $0x1c] sm:$0xf]
        %v892 = vld [vmem:[%s330 + $0x20] sm:$0xf]
        %v893 = vld [vmem:[%s330 + $0x24] sm:$0xf]
        %v894 = vld [vmem:[%s330 + $0x28] sm:$0xf]
        %v895 = vld [vmem:[%s330 + $0x2c] sm:$0xf]
        %v896 = vld [vmem:[%s330 + $0x30] sm:$0xf]
        %v897 = vld [vmem:[%s330 + $0x34] sm:$0xf]
        %v898 = vld [vmem:[%s330 + $0x38] sm:$0xf]
        %v899 = vld [vmem:[%s330 + $0x3c] sm:$0xf]
        %s900 = smul.u32 %s25, 8
        %s901 = smul.u32 %s854, 8
        %s902 = sadd.s32 %s900, %s901
        %s903 = smul.addr %s902, 8
        %s904 = scalar_lea.vmem [#allocation2], %s903
        %v905 = vld [vmem:[%s904] sm:$0xff]
        %v906 = vld [vmem:[%s904 + $0x8] sm:$0xff]
        %v907 = vld [vmem:[%s904 + $0x10] sm:$0xff]
        %v908 = vld [vmem:[%s904 + $0x18] sm:$0xff]
        %v909 = vld [vmem:[%s904 + $0x20] sm:$0xff]
        %v910 = vld [vmem:[%s904 + $0x28] sm:$0xff]
        %v911 = vld [vmem:[%s904 + $0x30] sm:$0xff]
        %v912 = vld [vmem:[%s904 + $0x38] sm:$0xff]
        %v929 = vunpack.c.l.b16 %v884
        %v930 = vunpack.c.l.b16 %v885
        %v931 = vunpack.c.l.b16 %v886
        %v932 = vunpack.c.l.b16 %v887
        %v933 = vunpack.c.l.b16 %v888
        %v934 = vunpack.c.l.b16 %v889
        %v935 = vunpack.c.l.b16 %v890
        %v936 = vunpack.c.l.b16 %v891
        %v937 = vunpack.c.l.b16 %v892
        %v938 = vunpack.c.l.b16 %v893
        %v939 = vunpack.c.l.b16 %v894
        %v940 = vunpack.c.l.b16 %v895
        %v941 = vunpack.c.l.b16 %v896
        %v942 = vunpack.c.l.b16 %v897
        %v943 = vunpack.c.l.b16 %v898
        %v944 = vunpack.c.l.b16 %v899
        %v945 = vpack.c.b16 %v930, %v929
        %v946 = vpack.c.b16 %v932, %v931
        %v947 = vpack.c.b16 %v934, %v933
        %v948 = vpack.c.b16 %v936, %v935
        %v949 = vpack.c.b16 %v938, %v937
        %v950 = vpack.c.b16 %v940, %v939
        %v951 = vpack.c.b16 %v942, %v941
        %v952 = vpack.c.b16 %v944, %v943
        %961 = vmatprep.subr.bf16.mxu0 0
        %962 = vmatpush1.bf16.msra.mxu0 %v905
        %963 = vmatprep.subr.bf16.mxu0 0
        %964 = vmatpush1.bf16.msra.mxu0 %v906
        %965 = vmatprep.subr.bf16.mxu0 0
        %966 = vmatpush1.bf16.msra.mxu0 %v907
        %967 = vmatprep.subr.bf16.mxu0 0
        %968 = vmatpush1.bf16.msra.mxu0 %v908
        %969 = vmatprep.subr.bf16.mxu0 0
        %970 = vmatpush1.bf16.msra.mxu0 %v909
        %971 = vmatprep.subr.bf16.mxu0 0
        %972 = vmatpush1.bf16.msra.mxu0 %v910
        %973 = vmatprep.subr.bf16.mxu0 0
        %974 = vmatpush1.bf16.msra.mxu0 %v911
        %975 = vmatprep.subr.bf16.mxu0 0
        %976 = vmatpush1.bf16.msra.mxu0 %v912
        %977 = vmatprep.subr.bf16.mxu0 0
        %978 = vmatpush1.bf16.msra.mxu0 0
        %979 = vmatprep.subr.bf16.mxu0 0
        %980 = vmatpush1.bf16.msra.mxu0 0
        %981 = vmatprep.subr.bf16.mxu0 0
        %982 = vmatpush1.bf16.msra.mxu0 0
        %983 = vmatprep.subr.bf16.mxu0 0
        %984 = vmatpush1.bf16.msra.mxu0 0
        %985 = vmatprep.subr.bf16.mxu0 0
        %986 = vmatpush1.bf16.msra.mxu0 0
        %987 = vmatprep.subr.bf16.mxu0 0
        %988 = vmatpush1.bf16.msra.mxu0 0
        %989 = vmatprep.subr.bf16.mxu0 0
        %990 = vmatpush1.bf16.msra.mxu0 0
        %991 = vmatprep.subr.bf16.mxu0 0
        %992 = vmatpush1.bf16.msra.mxu0 0
        %993 = vmatprep.mubr.bf16.mxu0 0
        %994 = vmatmul.mubr.bf16.gmra.mrb[0].mxu0 %v945
        %v995 = vpop.f32.mrb[0].mxu0
        %v996 = vadd.f32 0.0, %v995
        %v997 = vpop.f32.mrb[0].mxu0
        %v998 = vpop.f32.mrb[0].mxu0
        %v999 = vadd.f32 0.0, %v998
        %v1000 = vpop.f32.mrb[0].mxu0
        %1001 = vmatprep.mubr.bf16.mxu0 0
        %1002 = vmatmul.mubr.bf16.gmra.mrb[0].mxu0 %v946
        %v1003 = vpop.f32.mrb[0].mxu0
        %v1004 = vadd.f32 0.0, %v1003
        %v1005 = vpop.f32.mrb[0].mxu0
        %v1006 = vpop.f32.mrb[0].mxu0
        %v1007 = vadd.f32 0.0, %v1006
        %v1008 = vpop.f32.mrb[0].mxu0
        %1009 = vmatprep.mubr.bf16.mxu0 0
        %1010 = vmatmul.mubr.bf16.gmra.mrb[0].mxu0 %v947
        %v1011 = vpop.f32.mrb[0].mxu0
        %v1012 = vadd.f32 0.0, %v1011
        %v1013 = vpop.f32.mrb[0].mxu0
        %v1014 = vpop.f32.mrb[0].mxu0
        %v1015 = vadd.f32 0.0, %v1014
        %v1016 = vpop.f32.mrb[0].mxu0
        %1017 = vmatprep.mubr.bf16.mxu0 0
        %1018 = vmatmul.mubr.bf16.gmra.mrb[0].mxu0 %v948
        %v1019 = vpop.f32.mrb[0].mxu0
        %v1020 = vadd.f32 0.0, %v1019
        %v1021 = vpop.f32.mrb[0].mxu0
        %v1022 = vpop.f32.mrb[0].mxu0
        %v1023 = vadd.f32 0.0, %v1022
        %v1024 = vpop.f32.mrb[0].mxu0
        %1025 = vmatprep.mubr.bf16.mxu0 0
        %1026 = vmatmul.mubr.bf16.gmra.mrb[0].mxu0 %v949
        %v1027 = vpop.f32.mrb[0].mxu0
        %v1028 = vadd.f32 0.0, %v1027
        %v1029 = vpop.f32.mrb[0].mxu0
        %v1030 = vpop.f32.mrb[0].mxu0
        %v1031 = vadd.f32 0.0, %v1030
        %v1032 = vpop.f32.mrb[0].mxu0
        %1033 = vmatprep.mubr.bf16.mxu0 0
        %1034 = vmatmul.mubr.bf16.gmra.mrb[0].mxu0 %v950
        %v1035 = vpop.f32.mrb[0].mxu0
        %v1036 = vadd.f32 0.0, %v1035
        %v1037 = vpop.f32.mrb[0].mxu0
        %v1038 = vpop.f32.mrb[0].mxu0
        %v1039 = vadd.f32 0.0, %v1038
        %v1040 = vpop.f32.mrb[0].mxu0
        %1041 = vmatprep.mubr.bf16.mxu0 0
        %1042 = vmatmul.mubr.bf16.gmra.mrb[0].mxu0 %v951
        %v1043 = vpop.f32.mrb[0].mxu0
        %v1044 = vadd.f32 0.0, %v1043
        %v1045 = vpop.f32.mrb[0].mxu0
        %v1046 = vpop.f32.mrb[0].mxu0
        %v1047 = vadd.f32 0.0, %v1046
        %v1048 = vpop.f32.mrb[0].mxu0
        %1049 = vmatprep.mubr.bf16.mxu0 0
        %1050 = vmatmul.mubr.bf16.gmra.mrb[0].mxu0 %v952
        %v1051 = vpop.f32.mrb[0].mxu0
        %v1052 = vadd.f32 0.0, %v1051
        %v1053 = vpop.f32.mrb[0].mxu0
        %v1054 = vpop.f32.mrb[0].mxu0
        %v1055 = vadd.f32 0.0, %v1054
        %v1056 = vpop.f32.mrb[0].mxu0
        %1057 = vdwg.mxu0
        %v1058 = vadd.f32 %v868, %v996
        %v1059 = vadd.f32 %v869, %v999
        %v1060 = vadd.f32 %v870, %v1004
        %v1061 = vadd.f32 %v871, %v1007
        %v1062 = vadd.f32 %v872, %v1012
        %v1063 = vadd.f32 %v873, %v1015
        %v1064 = vadd.f32 %v874, %v1020
        %v1065 = vadd.f32 %v875, %v1023
        %v1066 = vadd.f32 %v876, %v1028
        %v1067 = vadd.f32 %v877, %v1031
        %v1068 = vadd.f32 %v878, %v1036
        %v1069 = vadd.f32 %v879, %v1039
        %v1070 = vadd.f32 %v880, %v1044
        %v1071 = vadd.f32 %v881, %v1047
        %v1072 = vadd.f32 %v882, %v1052
        %v1073 = vadd.f32 %v883, %v1055
        %1074 = vst [vmem:[#allocation4] sm:$0xff] %v1058
        %1075 = vst [vmem:[#allocation4 + $0x8] sm:$0xff] %v1059
        %1076 = vst [vmem:[#allocation4 + $0x10] sm:$0xff] %v1060
        %1077 = vst [vmem:[#allocation4 + $0x18] sm:$0xff] %v1061
        %1078 = vst [vmem:[#allocation4 + $0x20] sm:$0xff] %v1062
        %1079 = vst [vmem:[#allocation4 + $0x28] sm:$0xff] %v1063
        %1080 = vst [vmem:[#allocation4 + $0x30] sm:$0xff] %v1064
        %1081 = vst [vmem:[#allocation4 + $0x38] sm:$0xff] %v1065
        %1082 = vst [vmem:[#allocation4 + $0x40] sm:$0xff] %v1066
        %1083 = vst [vmem:[#allocation4 + $0x48] sm:$0xff] %v1067
        %1084 = vst [vmem:[#allocation4 + $0x50] sm:$0xff] %v1068
        %1085 = vst [vmem:[#allocation4 + $0x58] sm:$0xff] %v1069
        %1086 = vst [vmem:[#allocation4 + $0x60] sm:$0xff] %v1070
        %1087 = vst [vmem:[#allocation4 + $0x68] sm:$0xff] %v1071
        %1088 = vst [vmem:[#allocation4 + $0x70] sm:$0xff] %v1072
        %1089 = vst [vmem:[#allocation4 + $0x78] sm:$0xff] %v1073
        // Predicated region
        $region53: #{tpu_custom_call.1} parent=43 // pred_check
          %p1090 = pneg %p334
        $region54: #{tpu_custom_call.1} parent=43 // pred_check_branch
          %1092 = sbr.rel (%p1090) target = $region56
        $region55: #{tpu_custom_call.1} parent=43 // pred_region
          %v1093 = vld [vmem:[#allocation4] sm:$0xff]
          %v1094 = vld [vmem:[#allocation4 + $0x8] sm:$0xff]
          %v1095 = vld [vmem:[#allocation4 + $0x10] sm:$0xff]
          %v1096 = vld [vmem:[#allocation4 + $0x18] sm:$0xff]
          %v1097 = vld [vmem:[#allocation4 + $0x20] sm:$0xff]
          %v1098 = vld [vmem:[#allocation4 + $0x28] sm:$0xff]
          %v1099 = vld [vmem:[#allocation4 + $0x30] sm:$0xff]
          %v1100 = vld [vmem:[#allocation4 + $0x38] sm:$0xff]
          %v1101 = vld [vmem:[#allocation4 + $0x40] sm:$0xff]
          %v1102 = vld [vmem:[#allocation4 + $0x48] sm:$0xff]
          %v1103 = vld [vmem:[#allocation4 + $0x50] sm:$0xff]
          %v1104 = vld [vmem:[#allocation4 + $0x58] sm:$0xff]
          %v1105 = vld [vmem:[#allocation4 + $0x60] sm:$0xff]
          %v1106 = vld [vmem:[#allocation4 + $0x68] sm:$0xff]
          %v1107 = vld [vmem:[#allocation4 + $0x70] sm:$0xff]
          %v1108 = vld [vmem:[#allocation4 + $0x78] sm:$0xff]
          %v1109 = vmul.f32 %v1093, 0.9
          %v1110 = vmul.f32 %v1094, 0.9
          %v1111 = vmul.f32 %v1095, 0.9
          %v1112 = vmul.f32 %v1096, 0.9
          %v1113 = vmul.f32 %v1097, 0.9
          %v1114 = vmul.f32 %v1098, 0.9
          %v1115 = vmul.f32 %v1099, 0.9
          %v1116 = vmul.f32 %v1100, 0.9
          %v1117 = vmul.f32 %v1101, 0.9
          %v1118 = vmul.f32 %v1102, 0.9
          %v1119 = vmul.f32 %v1103, 0.9
          %v1120 = vmul.f32 %v1104, 0.9
          %v1121 = vmul.f32 %v1105, 0.9
          %v1122 = vmul.f32 %v1106, 0.9
          %v1123 = vmul.f32 %v1107, 0.9
          %v1124 = vmul.f32 %v1108, 0.9
          %s1125 = smul.u32 %s24, 128
          %s1126 = scalar_lea.vmem [#allocation3], %s1125
          %v1127 = vld [vmem:[%s1126] sm:$0xff]
          %v1128 = vld [vmem:[%s1126 + $0x8] sm:$0xff]
          %v1129 = vld [vmem:[%s1126 + $0x10] sm:$0xff]
          %v1130 = vld [vmem:[%s1126 + $0x18] sm:$0xff]
          %v1131 = vld [vmem:[%s1126 + $0x20] sm:$0xff]
          %v1132 = vld [vmem:[%s1126 + $0x28] sm:$0xff]
          %v1133 = vld [vmem:[%s1126 + $0x30] sm:$0xff]
          %v1134 = vld [vmem:[%s1126 + $0x38] sm:$0xff]
          %v1135 = vld [vmem:[%s1126 + $0x40] sm:$0xff]
          %v1136 = vld [vmem:[%s1126 + $0x48] sm:$0xff]
          %v1137 = vld [vmem:[%s1126 + $0x50] sm:$0xff]
          %v1138 = vld [vmem:[%s1126 + $0x58] sm:$0xff]
          %v1139 = vld [vmem:[%s1126 + $0x60] sm:$0xff]
          %v1140 = vld [vmem:[%s1126 + $0x68] sm:$0xff]
          %v1141 = vld [vmem:[%s1126 + $0x70] sm:$0xff]
          %v1142 = vld [vmem:[%s1126 + $0x78] sm:$0xff]
          %v1143 = vmul.f32 %v1127, 0.1
          %v1144 = vmul.f32 %v1128, 0.1
          %v1145 = vmul.f32 %v1129, 0.1
          %v1146 = vmul.f32 %v1130, 0.1
          %v1147 = vmul.f32 %v1131, 0.1
          %v1148 = vmul.f32 %v1132, 0.1
          %v1149 = vmul.f32 %v1133, 0.1
          %v1150 = vmul.f32 %v1134, 0.1
          %v1151 = vmul.f32 %v1135, 0.1
          %v1152 = vmul.f32 %v1136, 0.1
          %v1153 = vmul.f32 %v1137, 0.1
          %v1154 = vmul.f32 %v1138, 0.1
          %v1155 = vmul.f32 %v1139, 0.1
          %v1156 = vmul.f32 %v1140, 0.1
          %v1157 = vmul.f32 %v1141, 0.1
          %v1158 = vmul.f32 %v1142, 0.1
          %v1159 = vadd.f32 %v1109, %v1143
          %v1160 = vadd.f32 %v1110, %v1144
          %v1161 = vadd.f32 %v1111, %v1145
          %v1162 = vadd.f32 %v1112, %v1146
          %v1163 = vadd.f32 %v1113, %v1147
          %v1164 = vadd.f32 %v1114, %v1148
          %v1165 = vadd.f32 %v1115, %v1149
          %v1166 = vadd.f32 %v1116, %v1150
          %v1167 = vadd.f32 %v1117, %v1151
          %v1168 = vadd.f32 %v1118, %v1152
          %v1169 = vadd.f32 %v1119, %v1153
          %v1170 = vadd.f32 %v1120, %v1154
          %v1171 = vadd.f32 %v1121, %v1155
          %v1172 = vadd.f32 %v1122, %v1156
          %v1173 = vadd.f32 %v1123, %v1157
          %v1174 = vadd.f32 %v1124, %v1158
          %v1175 = vpack.c.bf16 %v1160, %v1159
          %v1176 = vpack.c.bf16 %v1162, %v1161
          %v1177 = vpack.c.bf16 %v1164, %v1163
          %v1178 = vpack.c.bf16 %v1166, %v1165
          %v1179 = vpack.c.bf16 %v1168, %v1167
          %v1180 = vpack.c.bf16 %v1170, %v1169
          %v1181 = vpack.c.bf16 %v1172, %v1171
          %v1182 = vpack.c.bf16 %v1174, %v1173
          %s1183 = smul.u32 %s24, 8
          %s1184 = smul.u32 %s867, 8
          %s1185 = sadd.s32 %s1183, %s1184
          %s1186 = smul.addr %s1185, 8
          %s1187 = scalar_lea.vmem [#allocation2], %s1186
          %1188 = vst [vmem:[%s1187] sm:$0xff] %v1175
          %1189 = vst [vmem:[%s1187 + $0x8] sm:$0xff] %v1176
          %1190 = vst [vmem:[%s1187 + $0x10] sm:$0xff] %v1177
          %1191 = vst [vmem:[%s1187 + $0x18] sm:$0xff] %v1178
          %1192 = vst [vmem:[%s1187 + $0x20] sm:$0xff] %v1179
          %1193 = vst [vmem:[%s1187 + $0x28] sm:$0xff] %v1180
          %1194 = vst [vmem:[%s1187 + $0x30] sm:$0xff] %v1181
          %1195 = vst [vmem:[%s1187 + $0x38] sm:$0xff] %v1182
          %p1196 = scmp.eq.s32.totalorder %s23, 7
          // Predicated region
          $region57: #{tpu_custom_call.1} parent=55 // pred_check
            %p1197 = pneg %p1196
          $region58: #{tpu_custom_call.1} parent=55 // pred_check_branch
            %1199 = sbr.rel (%p1197) target = $region60
          $region59: #{tpu_custom_call.1} parent=55 // pred_region
            %v1200 = vlaneseq
            %v1201 = vand.u32 %v1200, 127
            %vm1202 = vcmp.lt.s32.totalorder %v1201, 16
            %v1203 = vsel %vm1202, %v1159, -1e+30
            %v1204 = vsel %vm1202, %v1160, -1e+30
            %v1205 = vsel %vm1202, %v1161, -1e+30
            %v1206 = vsel %vm1202, %v1162, -1e+30
            %v1207 = vsel %vm1202, %v1163, -1e+30
            %v1208 = vsel %vm1202, %v1164, -1e+30
            %v1209 = vsel %vm1202, %v1165, -1e+30
            %v1210 = vsel %vm1202, %v1166, -1e+30
            %v1211 = vsel %vm1202, %v1167, -1e+30
            %v1212 = vsel %vm1202, %v1168, -1e+30
            %v1213 = vsel %vm1202, %v1169, -1e+30
            %v1214 = vsel %vm1202, %v1170, -1e+30
            %v1215 = vsel %vm1202, %v1171, -1e+30
            %v1216 = vsel %vm1202, %v1172, -1e+30
            %v1217 = vsel %vm1202, %v1173, -1e+30
            %v1218 = vsel %vm1202, %v1174, -1e+30
            %1219 = vmax.xlane.f32.xlu0 %v1203
            %v1220 = vpop.xlane.xlu0 %1219
            %1221 = vmax.xlane.f32.xlu0 %v1204
            %v1222 = vpop.xlane.xlu0 %1221
            %1223 = vmax.xlane.f32.xlu0 %v1205
            %v1224 = vpop.xlane.xlu0 %1223
            %1225 = vmax.xlane.f32.xlu0 %v1206
            %v1226 = vpop.xlane.xlu0 %1225
            %1227 = vmax.xlane.f32.xlu0 %v1207
            %v1228 = vpop.xlane.xlu0 %1227
            %1229 = vmax.xlane.f32.xlu0 %v1208
            %v1230 = vpop.xlane.xlu0 %1229
            %1231 = vmax.xlane.f32.xlu0 %v1209
            %v1232 = vpop.xlane.xlu0 %1231
            %1233 = vmax.xlane.f32.xlu0 %v1210
            %v1234 = vpop.xlane.xlu0 %1233
            %1235 = vmax.xlane.f32.xlu0 %v1211
            %v1236 = vpop.xlane.xlu0 %1235
            %1237 = vmax.xlane.f32.xlu0 %v1212
            %v1238 = vpop.xlane.xlu0 %1237
            %1239 = vmax.xlane.f32.xlu0 %v1213
            %v1240 = vpop.xlane.xlu0 %1239
            %1241 = vmax.xlane.f32.xlu0 %v1214
            %v1242 = vpop.xlane.xlu0 %1241
            %1243 = vmax.xlane.f32.xlu0 %v1215
            %v1244 = vpop.xlane.xlu0 %1243
            %1245 = vmax.xlane.f32.xlu0 %v1216
            %v1246 = vpop.xlane.xlu0 %1245
            %1247 = vmax.xlane.f32.xlu0 %v1217
            %v1248 = vpop.xlane.xlu0 %1247
            %1249 = vmax.xlane.f32.xlu0 %v1218
            %v1250 = vpop.xlane.xlu0 %1249
            %v1251 = vsub.f32 %v1203, %v1220
            %v1252 = vsub.f32 %v1204, %v1222
            %v1253 = vsub.f32 %v1205, %v1224
            %v1254 = vsub.f32 %v1206, %v1226
            %v1255 = vsub.f32 %v1207, %v1228
            %v1256 = vsub.f32 %v1208, %v1230
            %v1257 = vsub.f32 %v1209, %v1232
            %v1258 = vsub.f32 %v1210, %v1234
            %v1259 = vsub.f32 %v1211, %v1236
            %v1260 = vsub.f32 %v1212, %v1238
            %v1261 = vsub.f32 %v1213, %v1240
            %v1262 = vsub.f32 %v1214, %v1242
            %v1263 = vsub.f32 %v1215, %v1244
            %v1264 = vsub.f32 %v1216, %v1246
            %v1265 = vsub.f32 %v1217, %v1248
            %v1266 = vsub.f32 %v1218, %v1250
            %v1267 = vmul.f32 %v1251, 1.442695
            %v1268 = vpow.pop %v1267
            %v1269 = vmul.f32 %v1252, 1.442695
            %v1270 = vpow.pop %v1269
            %v1271 = vmul.f32 %v1253, 1.442695
            %v1272 = vpow.pop %v1271
            %v1273 = vmul.f32 %v1254, 1.442695
            %v1274 = vpow.pop %v1273
            %v1275 = vmul.f32 %v1255, 1.442695
            %v1276 = vpow.pop %v1275
            %v1277 = vmul.f32 %v1256, 1.442695
            %v1278 = vpow.pop %v1277
            %v1279 = vmul.f32 %v1257, 1.442695
            %v1280 = vpow.pop %v1279
            %v1281 = vmul.f32 %v1258, 1.442695
            %v1282 = vpow.pop %v1281
            %v1283 = vmul.f32 %v1259, 1.442695
            %v1284 = vpow.pop %v1283
            %v1285 = vmul.f32 %v1260, 1.442695
            %v1286 = vpow.pop %v1285
            %v1287 = vmul.f32 %v1261, 1.442695
            %v1288 = vpow.pop %v1287
            %v1289 = vmul.f32 %v1262, 1.442695
            %v1290 = vpow.pop %v1289
            %v1291 = vmul.f32 %v1263, 1.442695
            %v1292 = vpow.pop %v1291
            %v1293 = vmul.f32 %v1264, 1.442695
            %v1294 = vpow.pop %v1293
            %v1295 = vmul.f32 %v1265, 1.442695
            %v1296 = vpow.pop %v1295
            %v1297 = vmul.f32 %v1266, 1.442695
            %v1298 = vpow.pop %v1297
            %1299 = vadd.xlane.f32.xlu0 %v1268
            %v1300 = vpop.xlane.xlu0 %1299
            %1301 = vadd.xlane.f32.xlu0 %v1270
            %v1302 = vpop.xlane.xlu0 %1301
            %1303 = vadd.xlane.f32.xlu0 %v1272
            %v1304 = vpop.xlane.xlu0 %1303
            %1305 = vadd.xlane.f32.xlu0 %v1274
            %v1306 = vpop.xlane.xlu0 %1305
            %1307 = vadd.xlane.f32.xlu0 %v1276
            %v1308 = vpop.xlane.xlu0 %1307
            %1309 = vadd.xlane.f32.xlu0 %v1278
            %v1310 = vpop.xlane.xlu0 %1309
            %1311 = vadd.xlane.f32.xlu0 %v1280
            %v1312 = vpop.xlane.xlu0 %1311
            %1313 = vadd.xlane.f32.xlu0 %v1282
            %v1314 = vpop.xlane.xlu0 %1313
            %1315 = vadd.xlane.f32.xlu0 %v1284
            %v1316 = vpop.xlane.xlu0 %1315
            %1317 = vadd.xlane.f32.xlu0 %v1286
            %v1318 = vpop.xlane.xlu0 %1317
            %1319 = vadd.xlane.f32.xlu0 %v1288
            %v1320 = vpop.xlane.xlu0 %1319
            %1321 = vadd.xlane.f32.xlu0 %v1290
            %v1322 = vpop.xlane.xlu0 %1321
            %1323 = vadd.xlane.f32.xlu0 %v1292
            %v1324 = vpop.xlane.xlu0 %1323
            %1325 = vadd.xlane.f32.xlu0 %v1294
            %v1326 = vpop.xlane.xlu0 %1325
            %1327 = vadd.xlane.f32.xlu0 %v1296
            %v1328 = vpop.xlane.xlu0 %1327
            %1329 = vadd.xlane.f32.xlu0 %v1298
            %v1330 = vpop.xlane.xlu0 %1329
            %v1331 = vlog2.pop %v1300
            %v1332 = vmul.f32 %v1331, 0.6931472
            %v1333 = vlog2.pop %v1302
            %v1334 = vmul.f32 %v1333, 0.6931472
            %v1335 = vlog2.pop %v1304
            %v1336 = vmul.f32 %v1335, 0.6931472
            %v1337 = vlog2.pop %v1306
            %v1338 = vmul.f32 %v1337, 0.6931472
            %v1339 = vlog2.pop %v1308
            %v1340 = vmul.f32 %v1339, 0.6931472
            %v1341 = vlog2.pop %v1310
            %v1342 = vmul.f32 %v1341, 0.6931472
            %v1343 = vlog2.pop %v1312
            %v1344 = vmul.f32 %v1343, 0.6931472
            %v1345 = vlog2.pop %v1314
            %v1346 = vmul.f32 %v1345, 0.6931472
            %v1347 = vlog2.pop %v1316
            %v1348 = vmul.f32 %v1347, 0.6931472
            %v1349 = vlog2.pop %v1318
            %v1350 = vmul.f32 %v1349, 0.6931472
            %v1351 = vlog2.pop %v1320
            %v1352 = vmul.f32 %v1351, 0.6931472
            %v1353 = vlog2.pop %v1322
            %v1354 = vmul.f32 %v1353, 0.6931472
            %v1355 = vlog2.pop %v1324
            %v1356 = vmul.f32 %v1355, 0.6931472
            %v1357 = vlog2.pop %v1326
            %v1358 = vmul.f32 %v1357, 0.6931472
            %v1359 = vlog2.pop %v1328
            %v1360 = vmul.f32 %v1359, 0.6931472
            %v1361 = vlog2.pop %v1330
            %v1362 = vmul.f32 %v1361, 0.6931472
            %v1363 = vsub.f32 %v1251, %v1332
            %v1364 = vsub.f32 %v1252, %v1334
            %v1365 = vsub.f32 %v1253, %v1336
            %v1366 = vsub.f32 %v1254, %v1338
            %v1367 = vsub.f32 %v1255, %v1340
            %v1368 = vsub.f32 %v1256, %v1342
            %v1369 = vsub.f32 %v1257, %v1344
            %v1370 = vsub.f32 %v1258, %v1346
            %v1371 = vsub.f32 %v1259, %v1348
            %v1372 = vsub.f32 %v1260, %v1350
            %v1373 = vsub.f32 %v1261, %v1352
            %v1374 = vsub.f32 %v1262, %v1354
            %v1375 = vsub.f32 %v1263, %v1356
            %v1376 = vsub.f32 %v1264, %v1358
            %v1377 = vsub.f32 %v1265, %v1360
            %v1378 = vsub.f32 %v1266, %v1362
            %1379 = vst [vmem:[#allocation5] sm:$0xff] %v1363
            %1380 = vst [vmem:[#allocation5 + $0x8] sm:$0xff] %v1364
            %1381 = vst [vmem:[#allocation5 + $0x10] sm:$0xff] %v1365
            %1382 = vst [vmem:[#allocation5 + $0x18] sm:$0xff] %v1366
            %1383 = vst [vmem:[#allocation5 + $0x20] sm:$0xff] %v1367
            %1384 = vst [vmem:[#allocation5 + $0x28] sm:$0xff] %v1368
            %1385 = vst [vmem:[#allocation5 + $0x30] sm:$0xff] %v1369
            %1386 = vst [vmem:[#allocation5 + $0x38] sm:$0xff] %v1370
            %1387 = vst [vmem:[#allocation5 + $0x40] sm:$0xff] %v1371
            %1388 = vst [vmem:[#allocation5 + $0x48] sm:$0xff] %v1372
            %1389 = vst [vmem:[#allocation5 + $0x50] sm:$0xff] %v1373
            %1390 = vst [vmem:[#allocation5 + $0x58] sm:$0xff] %v1374
            %1391 = vst [vmem:[#allocation5 + $0x60] sm:$0xff] %v1375
            %1392 = vst [vmem:[#allocation5 + $0x68] sm:$0xff] %v1376
            %1393 = vst [vmem:[#allocation5 + $0x70] sm:$0xff] %v1377
            %1394 = vst [vmem:[#allocation5 + $0x78] sm:$0xff] %v1378
          $region60: #{tpu_custom_call.1} parent=55 // pred_fallthru
            _
        $region56: #{tpu_custom_call.1} parent=43 // pred_fallthru
          _
        // Predicated region
        $region61: #{tpu_custom_call.1} parent=43 // pred_check
          %p1395 = pneg %p203
        $region62: #{tpu_custom_call.1} parent=43 // pred_check_branch
          %1397 = sbr.rel (%p1395) target = $region64
        $region63: #{tpu_custom_call.1} parent=43 // pred_region
          %s1398 = smul.u32 16, %s24
          %s1400 = ssub.s32 2048, 2048
          %1401 = vsyncadd [#allocation6], %s1400
          %s1402 = smul.addr %s1398, 128
          %s1403 = scalar_lea.hbm %s6, %s1402
          %s1404 = sshll.u32 [#allocation5], 4
          %s1405 = int_to_ptr.vmem [resolvable:$true] %s1404
          %1410 = dma.vmem_to_hbm [thread:$0]  %s1405, 2048, %s1403, [#allocation6], 128, 128, 8
        $region64: #{tpu_custom_call.1} parent=43 // pred_fallthru
          _
        // Predicated region
        $region65: #{tpu_custom_call.1} parent=43 // pred_check
          %p1411 = pneg %p203
        $region66: #{tpu_custom_call.1} parent=43 // pred_check_branch
          %1413 = sbr.rel (%p1411) target = $region68
        $region67: #{tpu_custom_call.1} parent=43 // pred_region
          %1414 = dma.done [#allocation6], 2048
        $region68: #{tpu_custom_call.1} parent=43 // pred_fallthru
          _
      $region44: #{tpu_custom_call.1} parent=5 // pred_fallthru
        _
      %p1415 = scmp.le.s32.totalorder 2, %s13
      // Predicated region
      $region69: #{tpu_custom_call.1} parent=5 // pred_check
        %p1416 = pneg %p1415
      $region70: #{tpu_custom_call.1} parent=5 // pred_check_branch
        %1418 = sbr.rel (%p1416) target = $region72
      $region71: #{tpu_custom_call.1} parent=5 // pred_region
        %s1419 = ssub.s32 %s13, 2
      $region72: #{tpu_custom_call.1} parent=5 // pred_fallthru
        _
    $region6: #{tpu_custom_call.1} parent=1 // loop_footer
      %s17 = sadd.s32 1, %s13
    $region7: #{tpu_custom_call.1} parent=1 // loop_footer_branch
      %12 = sbr.rel target = $region3
    $region8: #{tpu_custom_call.1} parent=1 // loop_exit
      _
    %1420 = vsyncpa [#allocation6], 1
    %s1421 = scalar_lea.sflag [#allocation6], 1
    %1422 = vsyncpa %s1421, 1

</llo_original>
